<compile_context>
chip_gen: v5e
topology: v5e:2x2
jax: 0.10.0
libtpu: 0.0.40
codegen_flags: <defaults>
</compile_context>

<pallas_src>
import jax
import jax.numpy as jnp
from jax.experimental import pallas as pl
from jax.experimental.pallas import tpu as pltpu

LATENT = 12
HIDDEN = 64
SLOPE = 0.2
EPS = 1e-6


def _lrelu(x):
    return jnp.where(x > 0, x, SLOPE * x)


def _dlrelu(x):
    # derivative of LeakyReLU as used by autograd (x > 0 -> 1, else slope)
    return jnp.where(x > 0, jnp.float32(1.0), jnp.float32(SLOPE))


def _round_up(n, m):
    return ((n + m - 1) // m) * m


# ----------------------------------------------------------------------------- kernel
def flow_kernel(x_ref, w0_ref, w1_ref, w2_ref, w3_ref, y_ref, diag_ref):
    # x_ref : (NG, TB, GF)      packed inputs (GF flows per group)
    # w0_ref: (NG, GF, W)       block-diagonal Linear(1,H) weights, W = GF*H
    # w1/w2 : (NG, W, W)        block-diagonal, pre-transposed (in, out)
    # w3_ref: (NG, W, GF)       block-diagonal Linear(H,1) weights
    # y_ref : (NG, TB, GF)      packed residuals
    # diag  : (TB, 1)           sum_flows log(|df/dx| + eps) per batch row
    tb = x_ref.shape[1]

    x = x_ref[...]
    w0 = w0_ref[...]
    w1 = w1_ref[...]
    w2 = w2_ref[...]
    w3 = w3_ref[...]

    # layer 0: block-diagonal Linear(1,H) for all GF flows of a group at once
    h0 = jnp.einsum('gbf,gfw->gbw', x, w0, preferred_element_type=jnp.float32)
    a0 = _lrelu(h0)
    w0_flat = jnp.sum(w0, axis=1)                     # (NG, W): per-lane input weight
    d0 = w0_flat[:, None, :] * _dlrelu(h0)            # d a0 / d x

    # fuse activation + derivative chains: one matmul per layer on 2*TB rows
    ad = jnp.concatenate([a0, d0], axis=1)            # (NG, 2*TB, W)

    def hidden_layer(ad, w):
        zd = jnp.einsum('gbw,gwk->gbk', ad, w, preferred_element_type=jnp.float32)
        z, dz = zd[:, :tb, :], zd[:, tb:, :]
        return jnp.concatenate([_lrelu(z), dz * _dlrelu(z)], axis=1)

    ad = hidden_layer(ad, w1)
    ad = hidden_layer(ad, w2)

    # final layer: block-diagonal Linear(H,1) -> GF outputs per group, for y and dy
    yd = jnp.einsum('gbw,gwf->gbf', ad, w3, preferred_element_type=jnp.float32)
    y, dy = yd[:, :tb, :], yd[:, tb:, :]

    y_ref[...] = y
    ld = jnp.log(jnp.abs(dy) + EPS)                   # (NG, TB, GF)
    diag_ref[...] = jnp.sum(jnp.sum(ld, axis=0), axis=-1, keepdims=True)


# --------------------------------------------------------------------------- wrapper
def _pack_weights(w0, w1, w2, w3, gf):
    """Pre-transpose to (in, out) and pack gf flows per group as block-diagonal."""
    L, H = w0.shape
    ng = L // gf
    W = gf * H
    eye = jnp.eye(gf, dtype=jnp.float32)

    w0r = w0.reshape(ng, gf, H)
    w0_bd = jnp.einsum('gfh,fe->gfeh', w0r, eye).reshape(ng, gf, W)

    def bd(wmat):  # (L, H_out, H_in) torch layout -> (NG, W_in, W_out) block-diag
        wt = jnp.swapaxes(wmat, 1, 2).reshape(ng, gf, H, H)   # (NG, GF, H_in, H_out)
        return jnp.einsum('gfhk,fe->gfhek', wt, eye).reshape(ng, W, W)

    w3r = w3.reshape(ng, gf, H)
    w3_bd = jnp.einsum('gfh,fe->gfhe', w3r, eye).reshape(ng, W, gf)
    return w0_bd, bd(w1), bd(w2), w3_bd


@jax.jit
def yuke_flow_forward(x, w0, w1, w2, w3):
    """x: (B, L) f32.  w0: (L,H)  w1,w2: (L,H,H) (out,in)  w3: (L,H)."""
    B, L = x.shape
    H = w0.shape[1]
    gf = 4 if L % 4 == 0 else (2 if L % 2 == 0 else 1)   # flows per 128/256-wide group
    ng = L // gf
    W = gf * H

    w0_bd, w1_bd, w2_bd, w3_bd = _pack_weights(w0, w1, w2, w3, gf)

    # batch tiling (multiple of 8 sublanes); weights stay resident across grid steps
    tb = min(128, _round_up(B, 8))
    bp = _round_up(B, tb)
    xp = jnp.pad(x, ((0, bp - B), (0, 0))) if bp != B else x
    x_p = xp.reshape(bp, ng, gf).transpose(1, 0, 2)       # (NG, Bp, GF)
    nbt = bp // tb

    y_p, diag = pl.pallas_call(
        flow_kernel,
        out_shape=(
            jax.ShapeDtypeStruct((ng, bp, gf), jnp.float32),   # packed residuals
            jax.ShapeDtypeStruct((bp, 1), jnp.float32),        # per-row log-sum
        ),
        grid_spec=pltpu.PrefetchScalarGridSpec(
            num_scalar_prefetch=0,
            grid=(nbt,),
            in_specs=[
                pl.BlockSpec((ng, tb, gf), lambda b: (0, b, 0)),
                pl.BlockSpec((ng, gf, W), lambda b: (0, 0, 0)),   # resident weights
                pl.BlockSpec((ng, W, W), lambda b: (0, 0, 0)),
                pl.BlockSpec((ng, W, W), lambda b: (0, 0, 0)),
                pl.BlockSpec((ng, W, gf), lambda b: (0, 0, 0)),
            ],
            out_specs=(
                pl.BlockSpec((ng, tb, gf), lambda b: (0, b, 0)),
                pl.BlockSpec((tb, 1), lambda b: (b, 0)),
            ),
        ),
        compiler_params=pltpu.CompilerParams(
            dimension_semantics=("parallel",)),
    )(x_p, w0_bd, w1_bd, w2_bd, w3_bd)

    # unpack residuals and assemble the (B, B) logdet on the host (layout plumbing)
    residuals = jnp.transpose(y_p, (1, 0, 2)).reshape(bp, L)[:B]
    diag_val = diag[:B, 0]
    off_val = jnp.float32(L) * jnp.log(jnp.float32(EPS))   # off-diag of J[:,0,:,0] is 0
    logdet = jnp.where(jnp.eye(B, dtype=bool), diag_val[:, None], off_val)
    return residuals, logdet


# ----------------------------------------------------------------- init + reference
def xavier_normal(key, shape):
    fan_out, fan_in = shape
    std = (2.0 / (fan_in + fan_out)) ** 0.5
    return std * jax.random.normal(key, shape, dtype=jnp.float32)


def init_params(key, latent=LATENT, hidden=HIDDEN):
    keys = jax.random.split(key, latent * 4).reshape(latent, 4, 2)
    w0 = jnp.stack([xavier_normal(keys[i, 0], (hidden, 1))[:, 0] for i in range(latent)])
    w1 = jnp.stack([xavier_normal(keys[i, 1], (hidden, hidden)) for i in range(latent)])
    w2 = jnp.stack([xavier_normal(keys[i, 2], (hidden, hidden)) for i in range(latent)])
    w3 = jnp.stack([xavier_normal(keys[i, 3], (1, hidden))[0, :] for i in range(latent)])
    return w0, w1, w2, w3


def reference_forward(x, w0, w1, w2, w3):
    # plain-JAX reference of the same math (unpacked, per-flow)
    h0 = x[:, :, None] * w0[None, :, :]
    a0 = _lrelu(h0)
    d0 = w0[None, :, :] * _dlrelu(h0)
    z1 = jnp.einsum('blh,lkh->blk', a0, w1)
    a1 = _lrelu(z1)
    d1 = jnp.einsum('blh,lkh->blk', d0, w1) * _dlrelu(z1)
    z2 = jnp.einsum('blh,lkh->blk', a1, w2)
    a2 = _lrelu(z2)
    d2 = jnp.einsum('blh,lkh->blk', d1, w2) * _dlrelu(z2)
    y = jnp.einsum('blh,lh->bl', a2, w3)
    dy = jnp.einsum('blh,lh->bl', d2, w3)
    B, L = x.shape
    diag_val = jnp.sum(jnp.log(jnp.abs(dy) + EPS), axis=1)
    off_val = L * jnp.log(jnp.float32(EPS))
    logdet = jnp.where(jnp.eye(B, dtype=bool), diag_val[:, None], off_val)
    return y, logdet


if __name__ == "__main__":
    key = jax.random.PRNGKey(0)
    k_x, k_p = jax.random.split(key)

    B = 8
    x = jax.random.normal(k_x, (B, LATENT), dtype=jnp.float32)
    w0, w1, w2, w3 = init_params(k_p)

    residuals, logdet = yuke_flow_forward(x, w0, w1, w2, w3)
    residuals = jax.block_until_ready(residuals)
    logdet = jax.block_until_ready(logdet)

    res_ref, logdet_ref = reference_forward(x, w0, w1, w2, w3)
    assert residuals.shape == (B, LATENT)
    assert logdet.shape == (B, B)
    assert jnp.allclose(residuals, res_ref, atol=1e-4, rtol=1e-4)
    assert jnp.allclose(logdet, logdet_ref, atol=1e-4, rtol=1e-4)

    print("KERNEL_OK")
</pallas_src>

<mosaic_0001>
module attributes {stable_mosaic.version = 11 : i64} {
  func.func @flow_kernel(%arg0: i32, %arg1: memref<3x8x4xf32, #tpu.memory_space<vmem>>, %arg2: memref<3x4x256xf32, #tpu.memory_space<vmem>>, %arg3: memref<3x256x256xf32, #tpu.memory_space<vmem>>, %arg4: memref<3x256x256xf32, #tpu.memory_space<vmem>>, %arg5: memref<3x256x4xf32, #tpu.memory_space<vmem>>, %arg6: memref<3x8x4xf32, #tpu.memory_space<vmem>>, %arg7: memref<8x1xf32, #tpu.memory_space<vmem>>) attributes {dimension_semantics = [#tpu.dimension_semantics<parallel>], iteration_bounds = array<i64: 1>, scalar_prefetch = 0 : i64, scratch_operands = 0 : i64, tpu.core_type = #tpu.core_type<tc>, window_params = [{transform_indices = @transform_0, window_bounds = array<i64: 3, 8, 4>}, {pipeline_mode = #tpu.pipeline_mode<synchronous>, transform_indices = @transform_1, window_bounds = array<i64: 3, 4, 256>}, {pipeline_mode = #tpu.pipeline_mode<synchronous>, transform_indices = @transform_2, window_bounds = array<i64: 3, 256, 256>}, {pipeline_mode = #tpu.pipeline_mode<synchronous>, transform_indices = @transform_3, window_bounds = array<i64: 3, 256, 256>}, {pipeline_mode = #tpu.pipeline_mode<synchronous>, transform_indices = @transform_4, window_bounds = array<i64: 3, 256, 4>}, {transform_indices = @transform_5, window_bounds = array<i64: 3, 8, 4>}, {transform_indices = @transform_6, window_bounds = array<i64: 8, 1>}]} {
    %c0 = arith.constant 0 : index
    %c0_0 = arith.constant 0 : index
    %c0_1 = arith.constant 0 : index
    %0 = vector.load %arg1[%c0, %c0_0, %c0_1] : memref<3x8x4xf32, #tpu.memory_space<vmem>>, vector<3x8x4xf32>
    %c0_2 = arith.constant 0 : index
    %c0_3 = arith.constant 0 : index
    %c0_4 = arith.constant 0 : index
    %1 = vector.load %arg2[%c0_2, %c0_3, %c0_4] : memref<3x4x256xf32, #tpu.memory_space<vmem>>, vector<3x4x256xf32>
    %c0_5 = arith.constant 0 : index
    %c0_6 = arith.constant 0 : index
    %c0_7 = arith.constant 0 : index
    %2 = vector.load %arg3[%c0_5, %c0_6, %c0_7] : memref<3x256x256xf32, #tpu.memory_space<vmem>>, vector<3x256x256xf32>
    %c0_8 = arith.constant 0 : index
    %c0_9 = arith.constant 0 : index
    %c0_10 = arith.constant 0 : index
    %3 = vector.load %arg4[%c0_8, %c0_9, %c0_10] : memref<3x256x256xf32, #tpu.memory_space<vmem>>, vector<3x256x256xf32>
    %c0_11 = arith.constant 0 : index
    %c0_12 = arith.constant 0 : index
    %c0_13 = arith.constant 0 : index
    %4 = vector.load %arg5[%c0_11, %c0_12, %c0_13] : memref<3x256x4xf32, #tpu.memory_space<vmem>>, vector<3x256x4xf32>
    "tpu.trace_start"() <{level = 10 : i32, message = "gbf,gfw->gbw"}> : () -> ()
    %cst = arith.constant dense<0.000000e+00> : vector<3x8x256xf32>
    %5 = tpu.matmul %0, %1, %cst {dimension_numbers = #tpu.dot_dimension_numbers<[2], [1], [1], [2], [0, 0, 0, 1, 1, 2], [0], [0]>} : vector<3x8x4xf32>, vector<3x4x256xf32>, vector<3x8x256xf32> -> vector<3x8x256xf32>
    %cst_14 = arith.constant 0.000000e+00 : f32
    "tpu.trace_stop"() : () -> ()
    %6 = vector.broadcast %cst_14 : f32 to vector<3x8x256xf32>
    %7 = arith.cmpf ogt, %5, %6 : vector<3x8x256xf32>
    %cst_15 = arith.constant 2.000000e-01 : f32
    %8 = vector.broadcast %cst_15 : f32 to vector<3x8x256xf32>
    %9 = arith.mulf %8, %5 : vector<3x8x256xf32>
    %10 = arith.select %7, %5, %9 : vector<3x8x256xi1>, vector<3x8x256xf32>
    %cst_16 = arith.constant dense<0.000000e+00> : vector<3x256xf32>
    %11 = vector.multi_reduction <add>, %1, %cst_16 [1] : vector<3x4x256xf32> to vector<3x256xf32>
    %12 = vector.shape_cast %11 : vector<3x256xf32> to vector<3x1x256xf32>
    %cst_17 = arith.constant 0.000000e+00 : f32
    %13 = vector.broadcast %cst_17 : f32 to vector<3x8x256xf32>
    %14 = arith.cmpf ogt, %5, %13 : vector<3x8x256xf32>
    %cst_18 = arith.constant 1.000000e+00 : f32
    %cst_19 = arith.constant 2.000000e-01 : f32
    %15 = vector.broadcast %cst_18 : f32 to vector<3x8x256xf32>
    %16 = vector.broadcast %cst_19 : f32 to vector<3x8x256xf32>
    %17 = arith.select %14, %15, %16 : vector<3x8x256xi1>, vector<3x8x256xf32>
    %18 = vector.broadcast %12 : vector<3x1x256xf32> to vector<3x8x256xf32>
    %19 = arith.mulf %18, %17 : vector<3x8x256xf32>
    %20 = tpu.concatenate %10, %19 in 1 : vector<3x8x256xf32>, vector<3x8x256xf32> -> vector<3x16x256xf32>
    "tpu.trace_start"() <{level = 10 : i32, message = "gbw,gwk->gbk"}> : () -> ()
    %cst_20 = arith.constant dense<0.000000e+00> : vector<3x16x256xf32>
    %21 = tpu.matmul %20, %2, %cst_20 {dimension_numbers = #tpu.dot_dimension_numbers<[2], [1], [1], [2], [0, 0, 0, 1, 1, 2], [0], [0]>} : vector<3x16x256xf32>, vector<3x256x256xf32>, vector<3x16x256xf32> -> vector<3x16x256xf32>
    "tpu.trace_stop"() : () -> ()
    %22 = vector.extract_strided_slice %21 {offsets = [0, 0, 0], sizes = [3, 8, 256], strides = [1, 1, 1]} : vector<3x16x256xf32> to vector<3x8x256xf32>
    %23 = vector.extract_strided_slice %21 {offsets = [0, 8, 0], sizes = [3, 8, 256], strides = [1, 1, 1]} : vector<3x16x256xf32> to vector<3x8x256xf32>
    %cst_21 = arith.constant 0.000000e+00 : f32
    %24 = vector.broadcast %cst_21 : f32 to vector<3x8x256xf32>
    %25 = arith.cmpf ogt, %22, %24 : vector<3x8x256xf32>
    %cst_22 = arith.constant 2.000000e-01 : f32
    %26 = vector.broadcast %cst_22 : f32 to vector<3x8x256xf32>
    %27 = arith.mulf %26, %22 : vector<3x8x256xf32>
    %28 = arith.select %25, %22, %27 : vector<3x8x256xi1>, vector<3x8x256xf32>
    %cst_23 = arith.constant 0.000000e+00 : f32
    %29 = vector.broadcast %cst_23 : f32 to vector<3x8x256xf32>
    %30 = arith.cmpf ogt, %22, %29 : vector<3x8x256xf32>
    %cst_24 = arith.constant 1.000000e+00 : f32
    %cst_25 = arith.constant 2.000000e-01 : f32
    %31 = vector.broadcast %cst_24 : f32 to vector<3x8x256xf32>
    %32 = vector.broadcast %cst_25 : f32 to vector<3x8x256xf32>
    %33 = arith.select %30, %31, %32 : vector<3x8x256xi1>, vector<3x8x256xf32>
    %34 = arith.mulf %23, %33 : vector<3x8x256xf32>
    %35 = tpu.concatenate %28, %34 in 1 : vector<3x8x256xf32>, vector<3x8x256xf32> -> vector<3x16x256xf32>
    "tpu.trace_start"() <{level = 10 : i32, message = "gbw,gwk->gbk"}> : () -> ()
    %cst_26 = arith.constant dense<0.000000e+00> : vector<3x16x256xf32>
    %36 = tpu.matmul %35, %3, %cst_26 {dimension_numbers = #tpu.dot_dimension_numbers<[2], [1], [1], [2], [0, 0, 0, 1, 1, 2], [0], [0]>} : vector<3x16x256xf32>, vector<3x256x256xf32>, vector<3x16x256xf32> -> vector<3x16x256xf32>
    "tpu.trace_stop"() : () -> ()
    %37 = vector.extract_strided_slice %36 {offsets = [0, 0, 0], sizes = [3, 8, 256], strides = [1, 1, 1]} : vector<3x16x256xf32> to vector<3x8x256xf32>
    %38 = vector.extract_strided_slice %36 {offsets = [0, 8, 0], sizes = [3, 8, 256], strides = [1, 1, 1]} : vector<3x16x256xf32> to vector<3x8x256xf32>
    %cst_27 = arith.constant 0.000000e+00 : f32
    %39 = vector.broadcast %cst_27 : f32 to vector<3x8x256xf32>
    %40 = arith.cmpf ogt, %37, %39 : vector<3x8x256xf32>
    %cst_28 = arith.constant 2.000000e-01 : f32
    %41 = vector.broadcast %cst_28 : f32 to vector<3x8x256xf32>
    %42 = arith.mulf %41, %37 : vector<3x8x256xf32>
    %43 = arith.select %40, %37, %42 : vector<3x8x256xi1>, vector<3x8x256xf32>
    %cst_29 = arith.constant 0.000000e+00 : f32
    %44 = vector.broadcast %cst_29 : f32 to vector<3x8x256xf32>
    %45 = arith.cmpf ogt, %37, %44 : vector<3x8x256xf32>
    %cst_30 = arith.constant 1.000000e+00 : f32
    %cst_31 = arith.constant 2.000000e-01 : f32
    %46 = vector.broadcast %cst_30 : f32 to vector<3x8x256xf32>
    %47 = vector.broadcast %cst_31 : f32 to vector<3x8x256xf32>
    %48 = arith.select %45, %46, %47 : vector<3x8x256xi1>, vector<3x8x256xf32>
    %49 = arith.mulf %38, %48 : vector<3x8x256xf32>
    %50 = tpu.concatenate %43, %49 in 1 : vector<3x8x256xf32>, vector<3x8x256xf32> -> vector<3x16x256xf32>
    "tpu.trace_start"() <{level = 10 : i32, message = "gbw,gwf->gbf"}> : () -> ()
    %cst_32 = arith.constant dense<0.000000e+00> : vector<3x16x4xf32>
    %51 = tpu.matmul %50, %4, %cst_32 {dimension_numbers = #tpu.dot_dimension_numbers<[2], [1], [1], [2], [0, 0, 0, 1, 1, 2], [0], [0]>} : vector<3x16x256xf32>, vector<3x256x4xf32>, vector<3x16x4xf32> -> vector<3x16x4xf32>
    "tpu.trace_stop"() : () -> ()
    %52 = vector.extract_strided_slice %51 {offsets = [0, 0, 0], sizes = [3, 8, 4], strides = [1, 1, 1]} : vector<3x16x4xf32> to vector<3x8x4xf32>
    %53 = vector.extract_strided_slice %51 {offsets = [0, 8, 0], sizes = [3, 8, 4], strides = [1, 1, 1]} : vector<3x16x4xf32> to vector<3x8x4xf32>
    %c0_33 = arith.constant 0 : index
    %c0_34 = arith.constant 0 : index
    %c0_35 = arith.constant 0 : index
    %54 = vector.load %arg6[%c0_33, %c0_34, %c0_35] : memref<3x8x4xf32, #tpu.memory_space<vmem>>, vector<3x8x4xf32>
    tpu.vector_store %arg6[%c0_33, %c0_34, %c0_35], %52 {strides = array<i32>} : memref<3x8x4xf32, #tpu.memory_space<vmem>>, vector<3x8x4xf32>,
    %55 = math.absf %53 : vector<3x8x4xf32>
    %cst_36 = arith.constant 9.99999997E-7 : f32
    %56 = vector.broadcast %cst_36 : f32 to vector<3x8x4xf32>
    %57 = arith.addf %55, %56 : vector<3x8x4xf32>
    %58 = math.log %57 : vector<3x8x4xf32>
    %cst_37 = arith.constant dense<0.000000e+00> : vector<8x4xf32>
    %59 = vector.multi_reduction <add>, %58, %cst_37 [0] : vector<3x8x4xf32> to vector<8x4xf32>
    %cst_38 = arith.constant dense<0.000000e+00> : vector<8xf32>
    %60 = vector.multi_reduction <add>, %59, %cst_38 [1] : vector<8x4xf32> to vector<8xf32>
    %61 = vector.shape_cast %60 : vector<8xf32> to vector<8x1xf32>
    %c0_39 = arith.constant 0 : index
    %c0_40 = arith.constant 0 : index
    %62 = vector.load %arg7[%c0_39, %c0_40] : memref<8x1xf32, #tpu.memory_space<vmem>>, vector<8x1xf32>
    tpu.vector_store %arg7[%c0_39, %c0_40], %61 {strides = array<i32>} : memref<8x1xf32, #tpu.memory_space<vmem>>, vector<8x1xf32>,
    return
  }
  func.func @transform_0(%arg0: i32) -> (i32, i32, i32) {
    %c0_i32 = arith.constant 0 : i32
    %c0_i32_0 = arith.constant 0 : i32
    %c0_i32_1 = arith.constant 0 : i32
    return %c0_i32, %arg0, %c0_i32_0 : i32, i32, i32
  }
  func.func @transform_1(%arg0: i32) -> (i32, i32, i32) {
    %c0_i32 = arith.constant 0 : i32
    %c0_i32_0 = arith.constant 0 : i32
    %c0_i32_1 = arith.constant 0 : i32
    %c0_i32_2 = arith.constant 0 : i32
    return %c0_i32, %c0_i32_0, %c0_i32_1 : i32, i32, i32
  }
  func.func @transform_2(%arg0: i32) -> (i32, i32, i32) {
    %c0_i32 = arith.constant 0 : i32
    %c0_i32_0 = arith.constant 0 : i32
    %c0_i32_1 = arith.constant 0 : i32
    %c0_i32_2 = arith.constant 0 : i32
    return %c0_i32, %c0_i32_0, %c0_i32_1 : i32, i32, i32
  }
  func.func @transform_3(%arg0: i32) -> (i32, i32, i32) {
    %c0_i32 = arith.constant 0 : i32
    %c0_i32_0 = arith.constant 0 : i32
    %c0_i32_1 = arith.constant 0 : i32
    %c0_i32_2 = arith.constant 0 : i32
    return %c0_i32, %c0_i32_0, %c0_i32_1 : i32, i32, i32
  }
  func.func @transform_4(%arg0: i32) -> (i32, i32, i32) {
    %c0_i32 = arith.constant 0 : i32
    %c0_i32_0 = arith.constant 0 : i32
    %c0_i32_1 = arith.constant 0 : i32
    %c0_i32_2 = arith.constant 0 : i32
    return %c0_i32, %c0_i32_0, %c0_i32_1 : i32, i32, i32
  }
  func.func @transform_5(%arg0: i32) -> (i32, i32, i32) {
    %c0_i32 = arith.constant 0 : i32
    %c0_i32_0 = arith.constant 0 : i32
    %c0_i32_1 = arith.constant 0 : i32
    return %c0_i32, %arg0, %c0_i32_0 : i32, i32, i32
  }
  func.func @transform_6(%arg0: i32) -> (i32, i32) {
    %c0_i32 = arith.constant 0 : i32
    %c0_i32_0 = arith.constant 0 : i32
    return %arg0, %c0_i32 : i32, i32
  }
}

</mosaic_0001>

<llo_original>
// kernel: yuke_flow_forward.1
$region0: #{yuke_flow_forward.1}
  #allocation0 [shape = 'u32[]', space=smem, size = 0x4, offset = 0x4, fixed_abs, tag = 'smem constant byte address 0x4 - core index']
  #allocation1 [shape = 'u32[72,128]{1,0:T(1,128)}', space=vmem, size = 0x9000, scoped, tag = 'internal scratch']
  %s0 = inlined_call_operand.vmem [shape: f32[3,8,4], index: 0, kind: input, shape index: {}]
  %s1 = inlined_call_operand.vmem [shape: f32[3,4,256], index: 1, kind: input, shape index: {}]
  %s2 = inlined_call_operand.vmem [shape: f32[3,256,256], index: 2, kind: input, shape index: {}]
  %s3 = inlined_call_operand.vmem [shape: f32[3,256,256], index: 3, kind: input, shape index: {}]
  %s4 = inlined_call_operand.vmem [shape: f32[3,256,4], index: 4, kind: input, shape index: {}]
  %s5 = inlined_call_operand.vmem [shape: f32[3,8,4], index: 5, kind: output, shape index: {0}]
  %s6 = inlined_call_operand.vmem [shape: f32[8,1], index: 6, kind: output, shape index: {1}]
  %7 = xla_tuple %s5, %s6
  %s8 = sld [smem:[#allocation0]]
  $region38: #{yuke_flow_forward.1} parent=0
    _
  %s10 = ssub.s32 1, %s8
  %s11 = scalar_select 0, %s10, %s8
  // Predicated region
  $region2: #{yuke_flow_forward.1} parent=0 // pred_check
    _
  $region3: #{yuke_flow_forward.1} parent=0 // pred_check_branch
    %13 = sbr.rel (0) target = $region5
  $region4: #{yuke_flow_forward.1} parent=0 // pred_region
    _
  $region5: #{yuke_flow_forward.1} parent=0 // pred_fallthru
    _
  // Predicated region
  $region6: #{yuke_flow_forward.1} parent=0 // pred_check
    _
  $region7: #{yuke_flow_forward.1} parent=0 // pred_check_branch
    %15 = sbr.rel (0) target = $region9
  $region8: #{yuke_flow_forward.1} parent=0 // pred_region
    _
  $region9: #{yuke_flow_forward.1} parent=0 // pred_fallthru
    _
  // Predicated region
  $region10: #{yuke_flow_forward.1} parent=0 // pred_check
    _
  $region11: #{yuke_flow_forward.1} parent=0 // pred_check_branch
    %17 = sbr.rel (0) target = $region13
  $region12: #{yuke_flow_forward.1} parent=0 // pred_region
    _
  $region13: #{yuke_flow_forward.1} parent=0 // pred_fallthru
    _
  // Predicated region
  $region14: #{yuke_flow_forward.1} parent=0 // pred_check
    _
  $region15: #{yuke_flow_forward.1} parent=0 // pred_check_branch
    %19 = sbr.rel (0) target = $region17
  $region16: #{yuke_flow_forward.1} parent=0 // pred_region
    _
  $region17: #{yuke_flow_forward.1} parent=0 // pred_fallthru
    _
  // Predicated region
  $region18: #{yuke_flow_forward.1} parent=0 // pred_check
    _
  $region19: #{yuke_flow_forward.1} parent=0 // pred_check_branch
    %21 = sbr.rel (0) target = $region21
  $region20: #{yuke_flow_forward.1} parent=0 // pred_region
    _
  $region21: #{yuke_flow_forward.1} parent=0 // pred_fallthru
    _
  %v22 = vld [vmem:[%s0] sm:$0xff]
  %v23 = vld [vmem:[%s0 + $0x8] sm:$0xff]
  %v24 = vld [vmem:[%s0 + $0x10] sm:$0xff]
  %v25 = vld [vmem:[%s1] sm:$0xff]
  %v26 = vld [vmem:[%s1 + $0x8] sm:$0xff]
  %v27 = vld [vmem:[%s1 + $0x10] sm:$0xff]
  %v28 = vld [vmem:[%s2] sm:$0xff]
  %v29 = vld [vmem:[%s2 + $0x8] sm:$0xff]
  %v30 = vld [vmem:[%s2 + $0x10] sm:$0xff]
  %v31 = vld [vmem:[%s2 + $0x18] sm:$0xff]
  %v32 = vld [vmem:[%s2 + $0x20] sm:$0xff]
  %v33 = vld [vmem:[%s2 + $0x28] sm:$0xff]
  %v34 = vld [vmem:[%s2 + $0x30] sm:$0xff]
  %v35 = vld [vmem:[%s2 + $0x38] sm:$0xff]
  %v36 = vld [vmem:[%s2 + $0x40] sm:$0xff]
  %v37 = vld [vmem:[%s2 + $0x48] sm:$0xff]
  %v38 = vld [vmem:[%s2 + $0x50] sm:$0xff]
  %v39 = vld [vmem:[%s2 + $0x58] sm:$0xff]
  %v40 = vld [vmem:[%s2 + $0x60] sm:$0xff]
  %v41 = vld [vmem:[%s2 + $0x68] sm:$0xff]
  %v42 = vld [vmem:[%s2 + $0x70] sm:$0xff]
  %v43 = vld [vmem:[%s2 + $0x78] sm:$0xff]
  %v44 = vld [vmem:[%s2 + $0x80] sm:$0xff]
  %v45 = vld [vmem:[%s2 + $0x88] sm:$0xff]
  %v46 = vld [vmem:[%s2 + $0x90] sm:$0xff]
  %v47 = vld [vmem:[%s2 + $0x98] sm:$0xff]
  %v48 = vld [vmem:[%s2 + $0xa0] sm:$0xff]
  %v49 = vld [vmem:[%s2 + $0xa8] sm:$0xff]
  %v50 = vld [vmem:[%s2 + $0xb0] sm:$0xff]
  %v51 = vld [vmem:[%s2 + $0xb8] sm:$0xff]
  %v52 = vld [vmem:[%s2 + $0xc0] sm:$0xff]
  %v53 = vld [vmem:[%s2 + $0xc8] sm:$0xff]
  %v54 = vld [vmem:[%s2 + $0xd0] sm:$0xff]
  %v55 = vld [vmem:[%s2 + $0xd8] sm:$0xff]
  %v56 = vld [vmem:[%s2 + $0xe0] sm:$0xff]
  %v57 = vld [vmem:[%s2 + $0xe8] sm:$0xff]
  %v58 = vld [vmem:[%s2 + $0xf0] sm:$0xff]
  %v59 = vld [vmem:[%s2 + $0xf8] sm:$0xff]
  %v60 = vld [vmem:[%s2 + $0x100] sm:$0xff]
  %v61 = vld [vmem:[%s2 + $0x108] sm:$0xff]
  %v62 = vld [vmem:[%s2 + $0x110] sm:$0xff]
  %v63 = vld [vmem:[%s2 + $0x118] sm:$0xff]
  %v64 = vld [vmem:[%s2 + $0x120] sm:$0xff]
  %v65 = vld [vmem:[%s2 + $0x128] sm:$0xff]
  %v66 = vld [vmem:[%s2 + $0x130] sm:$0xff]
  %v67 = vld [vmem:[%s2 + $0x138] sm:$0xff]
  %v68 = vld [vmem:[%s2 + $0x140] sm:$0xff]
  %v69 = vld [vmem:[%s2 + $0x148] sm:$0xff]
  %v70 = vld [vmem:[%s2 + $0x150] sm:$0xff]
  %v71 = vld [vmem:[%s2 + $0x158] sm:$0xff]
  %v72 = vld [vmem:[%s2 + $0x160] sm:$0xff]
  %v73 = vld [vmem:[%s2 + $0x168] sm:$0xff]
  %v74 = vld [vmem:[%s2 + $0x170] sm:$0xff]
  %v75 = vld [vmem:[%s2 + $0x178] sm:$0xff]
  %v76 = vld [vmem:[%s2 + $0x180] sm:$0xff]
  %v77 = vld [vmem:[%s2 + $0x188] sm:$0xff]
  %v78 = vld [vmem:[%s2 + $0x190] sm:$0xff]
  %v79 = vld [vmem:[%s2 + $0x198] sm:$0xff]
  %v80 = vld [vmem:[%s2 + $0x1a0] sm:$0xff]
  %v81 = vld [vmem:[%s2 + $0x1a8] sm:$0xff]
  %v82 = vld [vmem:[%s2 + $0x1b0] sm:$0xff]
  %v83 = vld [vmem:[%s2 + $0x1b8] sm:$0xff]
  %v84 = vld [vmem:[%s2 + $0x1c0] sm:$0xff]
  %v85 = vld [vmem:[%s2 + $0x1c8] sm:$0xff]
  %v86 = vld [vmem:[%s2 + $0x1d0] sm:$0xff]
  %v87 = vld [vmem:[%s2 + $0x1d8] sm:$0xff]
  %v88 = vld [vmem:[%s2 + $0x1e0] sm:$0xff]
  %v89 = vld [vmem:[%s2 + $0x1e8] sm:$0xff]
  %v90 = vld [vmem:[%s2 + $0x1f0] sm:$0xff]
  %v91 = vld [vmem:[%s2 + $0x1f8] sm:$0xff]
  %v92 = vld [vmem:[%s2 + $0x200] sm:$0xff]
  %v93 = vld [vmem:[%s2 + $0x208] sm:$0xff]
  %v94 = vld [vmem:[%s2 + $0x210] sm:$0xff]
  %v95 = vld [vmem:[%s2 + $0x218] sm:$0xff]
  %v96 = vld [vmem:[%s2 + $0x220] sm:$0xff]
  %v97 = vld [vmem:[%s2 + $0x228] sm:$0xff]
  %v98 = vld [vmem:[%s2 + $0x230] sm:$0xff]
  %v99 = vld [vmem:[%s2 + $0x238] sm:$0xff]
  %v100 = vld [vmem:[%s2 + $0x240] sm:$0xff]
  %v101 = vld [vmem:[%s2 + $0x248] sm:$0xff]
  %v102 = vld [vmem:[%s2 + $0x250] sm:$0xff]
  %v103 = vld [vmem:[%s2 + $0x258] sm:$0xff]
  %v104 = vld [vmem:[%s2 + $0x260] sm:$0xff]
  %v105 = vld [vmem:[%s2 + $0x268] sm:$0xff]
  %v106 = vld [vmem:[%s2 + $0x270] sm:$0xff]
  %v107 = vld [vmem:[%s2 + $0x278] sm:$0xff]
  %v108 = vld [vmem:[%s2 + $0x280] sm:$0xff]
  %v109 = vld [vmem:[%s2 + $0x288] sm:$0xff]
  %v110 = vld [vmem:[%s2 + $0x290] sm:$0xff]
  %v111 = vld [vmem:[%s2 + $0x298] sm:$0xff]
  %v112 = vld [vmem:[%s2 + $0x2a0] sm:$0xff]
  %v113 = vld [vmem:[%s2 + $0x2a8] sm:$0xff]
  %v114 = vld [vmem:[%s2 + $0x2b0] sm:$0xff]
  %v115 = vld [vmem:[%s2 + $0x2b8] sm:$0xff]
  %v116 = vld [vmem:[%s2 + $0x2c0] sm:$0xff]
  %v117 = vld [vmem:[%s2 + $0x2c8] sm:$0xff]
  %v118 = vld [vmem:[%s2 + $0x2d0] sm:$0xff]
  %v119 = vld [vmem:[%s2 + $0x2d8] sm:$0xff]
  %v120 = vld [vmem:[%s2 + $0x2e0] sm:$0xff]
  %v121 = vld [vmem:[%s2 + $0x2e8] sm:$0xff]
  %v122 = vld [vmem:[%s2 + $0x2f0] sm:$0xff]
  %v123 = vld [vmem:[%s2 + $0x2f8] sm:$0xff]
  %v124 = vld [vmem:[%s2 + $0x300] sm:$0xff]
  %v125 = vld [vmem:[%s2 + $0x308] sm:$0xff]
  %v126 = vld [vmem:[%s2 + $0x310] sm:$0xff]
  %v127 = vld [vmem:[%s2 + $0x318] sm:$0xff]
  %v128 = vld [vmem:[%s2 + $0x320] sm:$0xff]
  %v129 = vld [vmem:[%s2 + $0x328] sm:$0xff]
  %v130 = vld [vmem:[%s2 + $0x330] sm:$0xff]
  %v131 = vld [vmem:[%s2 + $0x338] sm:$0xff]
  %v132 = vld [vmem:[%s2 + $0x340] sm:$0xff]
  %v133 = vld [vmem:[%s2 + $0x348] sm:$0xff]
  %v134 = vld [vmem:[%s2 + $0x350] sm:$0xff]
  %v135 = vld [vmem:[%s2 + $0x358] sm:$0xff]
  %v136 = vld [vmem:[%s2 + $0x360] sm:$0xff]
  %v137 = vld [vmem:[%s2 + $0x368] sm:$0xff]
  %v138 = vld [vmem:[%s2 + $0x370] sm:$0xff]
  %v139 = vld [vmem:[%s2 + $0x378] sm:$0xff]
  %v140 = vld [vmem:[%s2 + $0x380] sm:$0xff]
  %v141 = vld [vmem:[%s2 + $0x388] sm:$0xff]
  %v142 = vld [vmem:[%s2 + $0x390] sm:$0xff]
  %v143 = vld [vmem:[%s2 + $0x398] sm:$0xff]
  %v144 = vld [vmem:[%s2 + $0x3a0] sm:$0xff]
  %v145 = vld [vmem:[%s2 + $0x3a8] sm:$0xff]
  %v146 = vld [vmem:[%s2 + $0x3b0] sm:$0xff]
  %v147 = vld [vmem:[%s2 + $0x3b8] sm:$0xff]
  %v148 = vld [vmem:[%s2 + $0x3c0] sm:$0xff]
  %v149 = vld [vmem:[%s2 + $0x3c8] sm:$0xff]
  %v150 = vld [vmem:[%s2 + $0x3d0] sm:$0xff]
  %v151 = vld [vmem:[%s2 + $0x3d8] sm:$0xff]
  %v152 = vld [vmem:[%s2 + $0x3e0] sm:$0xff]
  %v153 = vld [vmem:[%s2 + $0x3e8] sm:$0xff]
  %v154 = vld [vmem:[%s2 + $0x3f0] sm:$0xff]
  %v155 = vld [vmem:[%s2 + $0x3f8] sm:$0xff]
  %v156 = vld [vmem:[%s2 + $0x400] sm:$0xff]
  %v157 = vld [vmem:[%s2 + $0x408] sm:$0xff]
  %v158 = vld [vmem:[%s2 + $0x410] sm:$0xff]
  %v159 = vld [vmem:[%s2 + $0x418] sm:$0xff]
  %v160 = vld [vmem:[%s2 + $0x420] sm:$0xff]
  %v161 = vld [vmem:[%s2 + $0x428] sm:$0xff]
  %v162 = vld [vmem:[%s2 + $0x430] sm:$0xff]
  %v163 = vld [vmem:[%s2 + $0x438] sm:$0xff]
  %v164 = vld [vmem:[%s2 + $0x440] sm:$0xff]
  %v165 = vld [vmem:[%s2 + $0x448] sm:$0xff]
  %v166 = vld [vmem:[%s2 + $0x450] sm:$0xff]
  %v167 = vld [vmem:[%s2 + $0x458] sm:$0xff]
  %v168 = vld [vmem:[%s2 + $0x460] sm:$0xff]
  %v169 = vld [vmem:[%s2 + $0x468] sm:$0xff]
  %v170 = vld [vmem:[%s2 + $0x470] sm:$0xff]
  %v171 = vld [vmem:[%s2 + $0x478] sm:$0xff]
  %v172 = vld [vmem:[%s2 + $0x480] sm:$0xff]
  %v173 = vld [vmem:[%s2 + $0x488] sm:$0xff]
  %v174 = vld [vmem:[%s2 + $0x490] sm:$0xff]
  %v175 = vld [vmem:[%s2 + $0x498] sm:$0xff]
  %v176 = vld [vmem:[%s2 + $0x4a0] sm:$0xff]
  %v177 = vld [vmem:[%s2 + $0x4a8] sm:$0xff]
  %v178 = vld [vmem:[%s2 + $0x4b0] sm:$0xff]
  %v179 = vld [vmem:[%s2 + $0x4b8] sm:$0xff]
  %v180 = vld [vmem:[%s2 + $0x4c0] sm:$0xff]
  %v181 = vld [vmem:[%s2 + $0x4c8] sm:$0xff]
  %v182 = vld [vmem:[%s2 + $0x4d0] sm:$0xff]
  %v183 = vld [vmem:[%s2 + $0x4d8] sm:$0xff]
  %v184 = vld [vmem:[%s2 + $0x4e0] sm:$0xff]
  %v185 = vld [vmem:[%s2 + $0x4e8] sm:$0xff]
  %v186 = vld [vmem:[%s2 + $0x4f0] sm:$0xff]
  %v187 = vld [vmem:[%s2 + $0x4f8] sm:$0xff]
  %v188 = vld [vmem:[%s2 + $0x500] sm:$0xff]
  %v189 = vld [vmem:[%s2 + $0x508] sm:$0xff]
  %v190 = vld [vmem:[%s2 + $0x510] sm:$0xff]
  %v191 = vld [vmem:[%s2 + $0x518] sm:$0xff]
  %v192 = vld [vmem:[%s2 + $0x520] sm:$0xff]
  %v193 = vld [vmem:[%s2 + $0x528] sm:$0xff]
  %v194 = vld [vmem:[%s2 + $0x530] sm:$0xff]
  %v195 = vld [vmem:[%s2 + $0x538] sm:$0xff]
  %v196 = vld [vmem:[%s2 + $0x540] sm:$0xff]
  %v197 = vld [vmem:[%s2 + $0x548] sm:$0xff]
  %v198 = vld [vmem:[%s2 + $0x550] sm:$0xff]
  %v199 = vld [vmem:[%s2 + $0x558] sm:$0xff]
  %v200 = vld [vmem:[%s2 + $0x560] sm:$0xff]
  %v201 = vld [vmem:[%s2 + $0x568] sm:$0xff]
  %v202 = vld [vmem:[%s2 + $0x570] sm:$0xff]
  %v203 = vld [vmem:[%s2 + $0x578] sm:$0xff]
  %v204 = vld [vmem:[%s2 + $0x580] sm:$0xff]
  %v205 = vld [vmem:[%s2 + $0x588] sm:$0xff]
  %v206 = vld [vmem:[%s2 + $0x590] sm:$0xff]
  %v207 = vld [vmem:[%s2 + $0x598] sm:$0xff]
  %v208 = vld [vmem:[%s2 + $0x5a0] sm:$0xff]
  %v209 = vld [vmem:[%s2 + $0x5a8] sm:$0xff]
  %v210 = vld [vmem:[%s2 + $0x5b0] sm:$0xff]
  %v211 = vld [vmem:[%s2 + $0x5b8] sm:$0xff]
  %v212 = vld [vmem:[%s2 + $0x5c0] sm:$0xff]
  %v213 = vld [vmem:[%s2 + $0x5c8] sm:$0xff]
  %v214 = vld [vmem:[%s2 + $0x5d0] sm:$0xff]
  %v215 = vld [vmem:[%s2 + $0x5d8] sm:$0xff]
  %v216 = vld [vmem:[%s2 + $0x5e0] sm:$0xff]
  %v217 = vld [vmem:[%s2 + $0x5e8] sm:$0xff]
  %v218 = vld [vmem:[%s2 + $0x5f0] sm:$0xff]
  %v219 = vld [vmem:[%s2 + $0x5f8] sm:$0xff]
  %v220 = vld [vmem:[%s3] sm:$0xff]
  %v221 = vld [vmem:[%s3 + $0x8] sm:$0xff]
  %v222 = vld [vmem:[%s3 + $0x10] sm:$0xff]
  %v223 = vld [vmem:[%s3 + $0x18] sm:$0xff]
  %v224 = vld [vmem:[%s3 + $0x20] sm:$0xff]
  %v225 = vld [vmem:[%s3 + $0x28] sm:$0xff]
  %v226 = vld [vmem:[%s3 + $0x30] sm:$0xff]
  %v227 = vld [vmem:[%s3 + $0x38] sm:$0xff]
  %v228 = vld [vmem:[%s3 + $0x40] sm:$0xff]
  %v229 = vld [vmem:[%s3 + $0x48] sm:$0xff]
  %v230 = vld [vmem:[%s3 + $0x50] sm:$0xff]
  %v231 = vld [vmem:[%s3 + $0x58] sm:$0xff]
  %v232 = vld [vmem:[%s3 + $0x60] sm:$0xff]
  %v233 = vld [vmem:[%s3 + $0x68] sm:$0xff]
  %v234 = vld [vmem:[%s3 + $0x70] sm:$0xff]
  %v235 = vld [vmem:[%s3 + $0x78] sm:$0xff]
  %v236 = vld [vmem:[%s3 + $0x80] sm:$0xff]
  %v237 = vld [vmem:[%s3 + $0x88] sm:$0xff]
  %v238 = vld [vmem:[%s3 + $0x90] sm:$0xff]
  %v239 = vld [vmem:[%s3 + $0x98] sm:$0xff]
  %v240 = vld [vmem:[%s3 + $0xa0] sm:$0xff]
  %v241 = vld [vmem:[%s3 + $0xa8] sm:$0xff]
  %v242 = vld [vmem:[%s3 + $0xb0] sm:$0xff]
  %v243 = vld [vmem:[%s3 + $0xb8] sm:$0xff]
  %v244 = vld [vmem:[%s3 + $0xc0] sm:$0xff]
  %v245 = vld [vmem:[%s3 + $0xc8] sm:$0xff]
  %v246 = vld [vmem:[%s3 + $0xd0] sm:$0xff]
  %v247 = vld [vmem:[%s3 + $0xd8] sm:$0xff]
  %v248 = vld [vmem:[%s3 + $0xe0] sm:$0xff]
  %v249 = vld [vmem:[%s3 + $0xe8] sm:$0xff]
  %v250 = vld [vmem:[%s3 + $0xf0] sm:$0xff]
  %v251 = vld [vmem:[%s3 + $0xf8] sm:$0xff]
  %v252 = vld [vmem:[%s3 + $0x100] sm:$0xff]
  %v253 = vld [vmem:[%s3 + $0x108] sm:$0xff]
  %v254 = vld [vmem:[%s3 + $0x110] sm:$0xff]
  %v255 = vld [vmem:[%s3 + $0x118] sm:$0xff]
  %v256 = vld [vmem:[%s3 + $0x120] sm:$0xff]
  %v257 = vld [vmem:[%s3 + $0x128] sm:$0xff]
  %v258 = vld [vmem:[%s3 + $0x130] sm:$0xff]
  %v259 = vld [vmem:[%s3 + $0x138] sm:$0xff]
  %v260 = vld [vmem:[%s3 + $0x140] sm:$0xff]
  %v261 = vld [vmem:[%s3 + $0x148] sm:$0xff]
  %v262 = vld [vmem:[%s3 + $0x150] sm:$0xff]
  %v263 = vld [vmem:[%s3 + $0x158] sm:$0xff]
  %v264 = vld [vmem:[%s3 + $0x160] sm:$0xff]
  %v265 = vld [vmem:[%s3 + $0x168] sm:$0xff]
  %v266 = vld [vmem:[%s3 + $0x170] sm:$0xff]
  %v267 = vld [vmem:[%s3 + $0x178] sm:$0xff]
  %v268 = vld [vmem:[%s3 + $0x180] sm:$0xff]
  %v269 = vld [vmem:[%s3 + $0x188] sm:$0xff]
  %v270 = vld [vmem:[%s3 + $0x190] sm:$0xff]
  %v271 = vld [vmem:[%s3 + $0x198] sm:$0xff]
  %v272 = vld [vmem:[%s3 + $0x1a0] sm:$0xff]
  %v273 = vld [vmem:[%s3 + $0x1a8] sm:$0xff]
  %v274 = vld [vmem:[%s3 + $0x1b0] sm:$0xff]
  %v275 = vld [vmem:[%s3 + $0x1b8] sm:$0xff]
  %v276 = vld [vmem:[%s3 + $0x1c0] sm:$0xff]
  %v277 = vld [vmem:[%s3 + $0x1c8] sm:$0xff]
  %v278 = vld [vmem:[%s3 + $0x1d0] sm:$0xff]
  %v279 = vld [vmem:[%s3 + $0x1d8] sm:$0xff]
  %v280 = vld [vmem:[%s3 + $0x1e0] sm:$0xff]
  %v281 = vld [vmem:[%s3 + $0x1e8] sm:$0xff]
  %v282 = vld [vmem:[%s3 + $0x1f0] sm:$0xff]
  %v283 = vld [vmem:[%s3 + $0x1f8] sm:$0xff]
  %v284 = vld [vmem:[%s3 + $0x200] sm:$0xff]
  %v285 = vld [vmem:[%s3 + $0x208] sm:$0xff]
  %v286 = vld [vmem:[%s3 + $0x210] sm:$0xff]
  %v287 = vld [vmem:[%s3 + $0x218] sm:$0xff]
  %v288 = vld [vmem:[%s3 + $0x220] sm:$0xff]
  %v289 = vld [vmem:[%s3 + $0x228] sm:$0xff]
  %v290 = vld [vmem:[%s3 + $0x230] sm:$0xff]
  %v291 = vld [vmem:[%s3 + $0x238] sm:$0xff]
  %v292 = vld [vmem:[%s3 + $0x240] sm:$0xff]
  %v293 = vld [vmem:[%s3 + $0x248] sm:$0xff]
  %v294 = vld [vmem:[%s3 + $0x250] sm:$0xff]
  %v295 = vld [vmem:[%s3 + $0x258] sm:$0xff]
  %v296 = vld [vmem:[%s3 + $0x260] sm:$0xff]
  %v297 = vld [vmem:[%s3 + $0x268] sm:$0xff]
  %v298 = vld [vmem:[%s3 + $0x270] sm:$0xff]
  %v299 = vld [vmem:[%s3 + $0x278] sm:$0xff]
  %v300 = vld [vmem:[%s3 + $0x280] sm:$0xff]
  %v301 = vld [vmem:[%s3 + $0x288] sm:$0xff]
  %v302 = vld [vmem:[%s3 + $0x290] sm:$0xff]
  %v303 = vld [vmem:[%s3 + $0x298] sm:$0xff]
  %v304 = vld [vmem:[%s3 + $0x2a0] sm:$0xff]
  %v305 = vld [vmem:[%s3 + $0x2a8] sm:$0xff]
  %v306 = vld [vmem:[%s3 + $0x2b0] sm:$0xff]
  %v307 = vld [vmem:[%s3 + $0x2b8] sm:$0xff]
  %v308 = vld [vmem:[%s3 + $0x2c0] sm:$0xff]
  %v309 = vld [vmem:[%s3 + $0x2c8] sm:$0xff]
  %v310 = vld [vmem:[%s3 + $0x2d0] sm:$0xff]
  %v311 = vld [vmem:[%s3 + $0x2d8] sm:$0xff]
  %v312 = vld [vmem:[%s3 + $0x2e0] sm:$0xff]
  %v313 = vld [vmem:[%s3 + $0x2e8] sm:$0xff]
  %v314 = vld [vmem:[%s3 + $0x2f0] sm:$0xff]
  %v315 = vld [vmem:[%s3 + $0x2f8] sm:$0xff]
  %v316 = vld [vmem:[%s3 + $0x300] sm:$0xff]
  %v317 = vld [vmem:[%s3 + $0x308] sm:$0xff]
  %v318 = vld [vmem:[%s3 + $0x310] sm:$0xff]
  %v319 = vld [vmem:[%s3 + $0x318] sm:$0xff]
  %v320 = vld [vmem:[%s3 + $0x320] sm:$0xff]
  %v321 = vld [vmem:[%s3 + $0x328] sm:$0xff]
  %v322 = vld [vmem:[%s3 + $0x330] sm:$0xff]
  %v323 = vld [vmem:[%s3 + $0x338] sm:$0xff]
  %v324 = vld [vmem:[%s3 + $0x340] sm:$0xff]
  %v325 = vld [vmem:[%s3 + $0x348] sm:$0xff]
  %v326 = vld [vmem:[%s3 + $0x350] sm:$0xff]
  %v327 = vld [vmem:[%s3 + $0x358] sm:$0xff]
  %v328 = vld [vmem:[%s3 + $0x360] sm:$0xff]
  %v329 = vld [vmem:[%s3 + $0x368] sm:$0xff]
  %v330 = vld [vmem:[%s3 + $0x370] sm:$0xff]
  %v331 = vld [vmem:[%s3 + $0x378] sm:$0xff]
  %v332 = vld [vmem:[%s3 + $0x380] sm:$0xff]
  %v333 = vld [vmem:[%s3 + $0x388] sm:$0xff]
  %v334 = vld [vmem:[%s3 + $0x390] sm:$0xff]
  %v335 = vld [vmem:[%s3 + $0x398] sm:$0xff]
  %v336 = vld [vmem:[%s3 + $0x3a0] sm:$0xff]
  %v337 = vld [vmem:[%s3 + $0x3a8] sm:$0xff]
  %v338 = vld [vmem:[%s3 + $0x3b0] sm:$0xff]
  %v339 = vld [vmem:[%s3 + $0x3b8] sm:$0xff]
  %v340 = vld [vmem:[%s3 + $0x3c0] sm:$0xff]
  %v341 = vld [vmem:[%s3 + $0x3c8] sm:$0xff]
  %v342 = vld [vmem:[%s3 + $0x3d0] sm:$0xff]
  %v343 = vld [vmem:[%s3 + $0x3d8] sm:$0xff]
  %v344 = vld [vmem:[%s3 + $0x3e0] sm:$0xff]
  %v345 = vld [vmem:[%s3 + $0x3e8] sm:$0xff]
  %v346 = vld [vmem:[%s3 + $0x3f0] sm:$0xff]
  %v347 = vld [vmem:[%s3 + $0x3f8] sm:$0xff]
  %v348 = vld [vmem:[%s3 + $0x400] sm:$0xff]
  %v349 = vld [vmem:[%s3 + $0x408] sm:$0xff]
  %v350 = vld [vmem:[%s3 + $0x410] sm:$0xff]
  %v351 = vld [vmem:[%s3 + $0x418] sm:$0xff]
  %v352 = vld [vmem:[%s3 + $0x420] sm:$0xff]
  %v353 = vld [vmem:[%s3 + $0x428] sm:$0xff]
  %v354 = vld [vmem:[%s3 + $0x430] sm:$0xff]
  %v355 = vld [vmem:[%s3 + $0x438] sm:$0xff]
  %v356 = vld [vmem:[%s3 + $0x440] sm:$0xff]
  %v357 = vld [vmem:[%s3 + $0x448] sm:$0xff]
  %v358 = vld [vmem:[%s3 + $0x450] sm:$0xff]
  %v359 = vld [vmem:[%s3 + $0x458] sm:$0xff]
  %v360 = vld [vmem:[%s3 + $0x460] sm:$0xff]
  %v361 = vld [vmem:[%s3 + $0x468] sm:$0xff]
  %v362 = vld [vmem:[%s3 + $0x470] sm:$0xff]
  %v363 = vld [vmem:[%s3 + $0x478] sm:$0xff]
  %v364 = vld [vmem:[%s3 + $0x480] sm:$0xff]
  %v365 = vld [vmem:[%s3 + $0x488] sm:$0xff]
  %v366 = vld [vmem:[%s3 + $0x490] sm:$0xff]
  %v367 = vld [vmem:[%s3 + $0x498] sm:$0xff]
  %v368 = vld [vmem:[%s3 + $0x4a0] sm:$0xff]
  %v369 = vld [vmem:[%s3 + $0x4a8] sm:$0xff]
  %v370 = vld [vmem:[%s3 + $0x4b0] sm:$0xff]
  %v371 = vld [vmem:[%s3 + $0x4b8] sm:$0xff]
  %v372 = vld [vmem:[%s3 + $0x4c0] sm:$0xff]
  %v373 = vld [vmem:[%s3 + $0x4c8] sm:$0xff]
  %v374 = vld [vmem:[%s3 + $0x4d0] sm:$0xff]
  %v375 = vld [vmem:[%s3 + $0x4d8] sm:$0xff]
  %v376 = vld [vmem:[%s3 + $0x4e0] sm:$0xff]
  %v377 = vld [vmem:[%s3 + $0x4e8] sm:$0xff]
  %v378 = vld [vmem:[%s3 + $0x4f0] sm:$0xff]
  %v379 = vld [vmem:[%s3 + $0x4f8] sm:$0xff]
  %v380 = vld [vmem:[%s3 + $0x500] sm:$0xff]
  %v381 = vld [vmem:[%s3 + $0x508] sm:$0xff]
  %v382 = vld [vmem:[%s3 + $0x510] sm:$0xff]
  %v383 = vld [vmem:[%s3 + $0x518] sm:$0xff]
  %v384 = vld [vmem:[%s3 + $0x520] sm:$0xff]
  %v385 = vld [vmem:[%s3 + $0x528] sm:$0xff]
  %v386 = vld [vmem:[%s3 + $0x530] sm:$0xff]
  %v387 = vld [vmem:[%s3 + $0x538] sm:$0xff]
  %v388 = vld [vmem:[%s3 + $0x540] sm:$0xff]
  %v389 = vld [vmem:[%s3 + $0x548] sm:$0xff]
  %v390 = vld [vmem:[%s3 + $0x550] sm:$0xff]
  %v391 = vld [vmem:[%s3 + $0x558] sm:$0xff]
  %v392 = vld [vmem:[%s3 + $0x560] sm:$0xff]
  %v393 = vld [vmem:[%s3 + $0x568] sm:$0xff]
  %v394 = vld [vmem:[%s3 + $0x570] sm:$0xff]
  %v395 = vld [vmem:[%s3 + $0x578] sm:$0xff]
  %v396 = vld [vmem:[%s3 + $0x580] sm:$0xff]
  %v397 = vld [vmem:[%s3 + $0x588] sm:$0xff]
  %v398 = vld [vmem:[%s3 + $0x590] sm:$0xff]
  %v399 = vld [vmem:[%s3 + $0x598] sm:$0xff]
  %v400 = vld [vmem:[%s3 + $0x5a0] sm:$0xff]
  %v401 = vld [vmem:[%s3 + $0x5a8] sm:$0xff]
  %v402 = vld [vmem:[%s3 + $0x5b0] sm:$0xff]
  %v403 = vld [vmem:[%s3 + $0x5b8] sm:$0xff]
  %v404 = vld [vmem:[%s3 + $0x5c0] sm:$0xff]
  %v405 = vld [vmem:[%s3 + $0x5c8] sm:$0xff]
  %v406 = vld [vmem:[%s3 + $0x5d0] sm:$0xff]
  %v407 = vld [vmem:[%s3 + $0x5d8] sm:$0xff]
  %v408 = vld [vmem:[%s3 + $0x5e0] sm:$0xff]
  %v409 = vld [vmem:[%s3 + $0x5e8] sm:$0xff]
  %v410 = vld [vmem:[%s3 + $0x5f0] sm:$0xff]
  %v411 = vld [vmem:[%s3 + $0x5f8] sm:$0xff]
  %v412 = vld [vmem:[%s4] sm:$0xff]
  %v413 = vld [vmem:[%s4 + $0x8] sm:$0xff]
  %v414 = vld [vmem:[%s4 + $0x10] sm:$0xff]
  %v415 = vld [vmem:[%s4 + $0x18] sm:$0xff]
  %v416 = vld [vmem:[%s4 + $0x20] sm:$0xff]
  %v417 = vld [vmem:[%s4 + $0x28] sm:$0xff]
  %v418 = vld [vmem:[%s4 + $0x30] sm:$0xff]
  %v419 = vld [vmem:[%s4 + $0x38] sm:$0xff]
  %v420 = vld [vmem:[%s4 + $0x40] sm:$0xff]
  %v421 = vld [vmem:[%s4 + $0x48] sm:$0xff]
  %v422 = vld [vmem:[%s4 + $0x50] sm:$0xff]
  %v423 = vld [vmem:[%s4 + $0x58] sm:$0xff]
  %v424 = vld [vmem:[%s4 + $0x60] sm:$0xff]
  %v425 = vld [vmem:[%s4 + $0x68] sm:$0xff]
  %v426 = vld [vmem:[%s4 + $0x70] sm:$0xff]
  %v427 = vld [vmem:[%s4 + $0x78] sm:$0xff]
  %v428 = vld [vmem:[%s4 + $0x80] sm:$0xff]
  %v429 = vld [vmem:[%s4 + $0x88] sm:$0xff]
  %v430 = vld [vmem:[%s4 + $0x90] sm:$0xff]
  %v431 = vld [vmem:[%s4 + $0x98] sm:$0xff]
  %v432 = vld [vmem:[%s4 + $0xa0] sm:$0xff]
  %v433 = vld [vmem:[%s4 + $0xa8] sm:$0xff]
  %v434 = vld [vmem:[%s4 + $0xb0] sm:$0xff]
  %v435 = vld [vmem:[%s4 + $0xb8] sm:$0xff]
  %v436 = vld [vmem:[%s4 + $0xc0] sm:$0xff]
  %v437 = vld [vmem:[%s4 + $0xc8] sm:$0xff]
  %v438 = vld [vmem:[%s4 + $0xd0] sm:$0xff]
  %v439 = vld [vmem:[%s4 + $0xd8] sm:$0xff]
  %v440 = vld [vmem:[%s4 + $0xe0] sm:$0xff]
  %v441 = vld [vmem:[%s4 + $0xe8] sm:$0xff]
  %v442 = vld [vmem:[%s4 + $0xf0] sm:$0xff]
  %v443 = vld [vmem:[%s4 + $0xf8] sm:$0xff]
  %v444 = vld [vmem:[%s4 + $0x100] sm:$0xff]
  %v445 = vld [vmem:[%s4 + $0x108] sm:$0xff]
  %v446 = vld [vmem:[%s4 + $0x110] sm:$0xff]
  %v447 = vld [vmem:[%s4 + $0x118] sm:$0xff]
  %v448 = vld [vmem:[%s4 + $0x120] sm:$0xff]
  %v449 = vld [vmem:[%s4 + $0x128] sm:$0xff]
  %v450 = vld [vmem:[%s4 + $0x130] sm:$0xff]
  %v451 = vld [vmem:[%s4 + $0x138] sm:$0xff]
  %v452 = vld [vmem:[%s4 + $0x140] sm:$0xff]
  %v453 = vld [vmem:[%s4 + $0x148] sm:$0xff]
  %v454 = vld [vmem:[%s4 + $0x150] sm:$0xff]
  %v455 = vld [vmem:[%s4 + $0x158] sm:$0xff]
  %v456 = vld [vmem:[%s4 + $0x160] sm:$0xff]
  %v457 = vld [vmem:[%s4 + $0x168] sm:$0xff]
  %v458 = vld [vmem:[%s4 + $0x170] sm:$0xff]
  %v459 = vld [vmem:[%s4 + $0x178] sm:$0xff]
  %v460 = vld [vmem:[%s4 + $0x180] sm:$0xff]
  %v461 = vld [vmem:[%s4 + $0x188] sm:$0xff]
  %v462 = vld [vmem:[%s4 + $0x190] sm:$0xff]
  %v463 = vld [vmem:[%s4 + $0x198] sm:$0xff]
  %v464 = vld [vmem:[%s4 + $0x1a0] sm:$0xff]
  %v465 = vld [vmem:[%s4 + $0x1a8] sm:$0xff]
  %v466 = vld [vmem:[%s4 + $0x1b0] sm:$0xff]
  %v467 = vld [vmem:[%s4 + $0x1b8] sm:$0xff]
  %v468 = vld [vmem:[%s4 + $0x1c0] sm:$0xff]
  %v469 = vld [vmem:[%s4 + $0x1c8] sm:$0xff]
  %v470 = vld [vmem:[%s4 + $0x1d0] sm:$0xff]
  %v471 = vld [vmem:[%s4 + $0x1d8] sm:$0xff]
  %v472 = vld [vmem:[%s4 + $0x1e0] sm:$0xff]
  %v473 = vld [vmem:[%s4 + $0x1e8] sm:$0xff]
  %v474 = vld [vmem:[%s4 + $0x1f0] sm:$0xff]
  %v475 = vld [vmem:[%s4 + $0x1f8] sm:$0xff]
  %v476 = vld [vmem:[%s4 + $0x200] sm:$0xff]
  %v477 = vld [vmem:[%s4 + $0x208] sm:$0xff]
  %v478 = vld [vmem:[%s4 + $0x210] sm:$0xff]
  %v479 = vld [vmem:[%s4 + $0x218] sm:$0xff]
  %v480 = vld [vmem:[%s4 + $0x220] sm:$0xff]
  %v481 = vld [vmem:[%s4 + $0x228] sm:$0xff]
  %v482 = vld [vmem:[%s4 + $0x230] sm:$0xff]
  %v483 = vld [vmem:[%s4 + $0x238] sm:$0xff]
  %v484 = vld [vmem:[%s4 + $0x240] sm:$0xff]
  %v485 = vld [vmem:[%s4 + $0x248] sm:$0xff]
  %v486 = vld [vmem:[%s4 + $0x250] sm:$0xff]
  %v487 = vld [vmem:[%s4 + $0x258] sm:$0xff]
  %v488 = vld [vmem:[%s4 + $0x260] sm:$0xff]
  %v489 = vld [vmem:[%s4 + $0x268] sm:$0xff]
  %v490 = vld [vmem:[%s4 + $0x270] sm:$0xff]
  %v491 = vld [vmem:[%s4 + $0x278] sm:$0xff]
  %v492 = vld [vmem:[%s4 + $0x280] sm:$0xff]
  %v493 = vld [vmem:[%s4 + $0x288] sm:$0xff]
  %v494 = vld [vmem:[%s4 + $0x290] sm:$0xff]
  %v495 = vld [vmem:[%s4 + $0x298] sm:$0xff]
  %v496 = vld [vmem:[%s4 + $0x2a0] sm:$0xff]
  %v497 = vld [vmem:[%s4 + $0x2a8] sm:$0xff]
  %v498 = vld [vmem:[%s4 + $0x2b0] sm:$0xff]
  %v499 = vld [vmem:[%s4 + $0x2b8] sm:$0xff]
  %v500 = vld [vmem:[%s4 + $0x2c0] sm:$0xff]
  %v501 = vld [vmem:[%s4 + $0x2c8] sm:$0xff]
  %v502 = vld [vmem:[%s4 + $0x2d0] sm:$0xff]
  %v503 = vld [vmem:[%s4 + $0x2d8] sm:$0xff]
  %v504 = vld [vmem:[%s4 + $0x2e0] sm:$0xff]
  %v505 = vld [vmem:[%s4 + $0x2e8] sm:$0xff]
  %v506 = vld [vmem:[%s4 + $0x2f0] sm:$0xff]
  %v507 = vld [vmem:[%s4 + $0x2f8] sm:$0xff]
  %509 = vst [vmem:[#allocation1] ss:$2 sm:$0xff] %v25
  %v510 = vld.sshfl [vmem:[#allocation1] sm:$0xff pattern:$0x75316420]
  %v511 = vld.sshfl [vmem:[#allocation1 + $0x8] sm:$0xff pattern:$0x75316420]
  %vm512 = vcmask 31744
  %v514 = vsel %vm512, %v22, 0
  %vm516 = vcmask 1043456
  %v517 = vsel %vm516, %v510, 0
  %v519 = vsel %vm516, %v511, 0
  %521 = vmatpush.msra.mxu0 0.0
  %522 = vmatpush.msra.mxu0 0.0
  %523 = vmatpush.msra.mxu0 0.0
  %524 = vmatpush.msra.mxu0 0.0
  %525 = vmatpush.msra.mxu0 0.0
  %526 = vmatpush.msra.mxu0 0.0
  %527 = vmatpush.msra.mxu0 0.0
  %528 = vmatpush.msra.mxu0 0.0
  %529 = vmatpush.msra.mxu0 0.0
  %530 = vmatpush.msra.mxu0 0.0
  %531 = vmatpush.msra.mxu0 0.0
  %532 = vmatpush.msra.mxu0 0.0
  %533 = vmatpush.msra.mxu0 0.0
  %534 = vmatpush.msra.mxu0 0.0
  %535 = vmatpush.msra.mxu0 0.0
  %536 = vmatpush.msra.mxu0 %v517
  %537 = vmatmul.f32.gmra.mxu0 %v514
  %v538 = vpop.f32.mrf.mxu0
  %v539 = vadd.f32 0.0, %v538
  %540 = vdwg.mxu0
  %541 = vmatpush.msra.mxu0 0.0
  %542 = vmatpush.msra.mxu0 0.0
  %543 = vmatpush.msra.mxu0 0.0
  %544 = vmatpush.msra.mxu0 0.0
  %545 = vmatpush.msra.mxu0 0.0
  %546 = vmatpush.msra.mxu0 0.0
  %547 = vmatpush.msra.mxu0 0.0
  %548 = vmatpush.msra.mxu0 0.0
  %549 = vmatpush.msra.mxu0 0.0
  %550 = vmatpush.msra.mxu0 0.0
  %551 = vmatpush.msra.mxu0 0.0
  %552 = vmatpush.msra.mxu0 0.0
  %553 = vmatpush.msra.mxu0 0.0
  %554 = vmatpush.msra.mxu0 0.0
  %555 = vmatpush.msra.mxu0 0.0
  %556 = vmatpush.msra.mxu0 %v519
  %557 = vmatmul.f32.gmra.mxu0 %v514
  %v558 = vpop.f32.mrf.mxu0
  %v559 = vadd.f32 0.0, %v558
  %560 = vdwg.mxu0
  %562 = vst [vmem:[#allocation1] ss:$2 sm:$0xff] %v26
  %v563 = vld.sshfl [vmem:[#allocation1] sm:$0xff pattern:$0x75316420]
  %v564 = vld.sshfl [vmem:[#allocation1 + $0x8] sm:$0xff pattern:$0x75316420]
  %v566 = vsel %vm512, %v23, 0
  %v568 = vsel %vm516, %v563, 0
  %v570 = vsel %vm516, %v564, 0
  %572 = vmatpush.msra.mxu0 0.0
  %573 = vmatpush.msra.mxu0 0.0
  %574 = vmatpush.msra.mxu0 0.0
  %575 = vmatpush.msra.mxu0 0.0
  %576 = vmatpush.msra.mxu0 0.0
  %577 = vmatpush.msra.mxu0 0.0
  %578 = vmatpush.msra.mxu0 0.0
  %579 = vmatpush.msra.mxu0 0.0
  %580 = vmatpush.msra.mxu0 0.0
  %581 = vmatpush.msra.mxu0 0.0
  %582 = vmatpush.msra.mxu0 0.0
  %583 = vmatpush.msra.mxu0 0.0
  %584 = vmatpush.msra.mxu0 0.0
  %585 = vmatpush.msra.mxu0 0.0
  %586 = vmatpush.msra.mxu0 0.0
  %587 = vmatpush.msra.mxu0 %v568
  %588 = vmatmul.f32.gmra.mxu0 %v566
  %v589 = vpop.f32.mrf.mxu0
  %v590 = vadd.f32 0.0, %v589
  %591 = vdwg.mxu0
  %592 = vmatpush.msra.mxu0 0.0
  %593 = vmatpush.msra.mxu0 0.0
  %594 = vmatpush.msra.mxu0 0.0
  %595 = vmatpush.msra.mxu0 0.0
  %596 = vmatpush.msra.mxu0 0.0
  %597 = vmatpush.msra.mxu0 0.0
  %598 = vmatpush.msra.mxu0 0.0
  %599 = vmatpush.msra.mxu0 0.0
  %600 = vmatpush.msra.mxu0 0.0
  %601 = vmatpush.msra.mxu0 0.0
  %602 = vmatpush.msra.mxu0 0.0
  %603 = vmatpush.msra.mxu0 0.0
  %604 = vmatpush.msra.mxu0 0.0
  %605 = vmatpush.msra.mxu0 0.0
  %606 = vmatpush.msra.mxu0 0.0
  %607 = vmatpush.msra.mxu0 %v570
  %608 = vmatmul.f32.gmra.mxu0 %v566
  %v609 = vpop.f32.mrf.mxu0
  %v610 = vadd.f32 0.0, %v609
  %611 = vdwg.mxu0
  %613 = vst [vmem:[#allocation1] ss:$2 sm:$0xff] %v27
  %v614 = vld.sshfl [vmem:[#allocation1] sm:$0xff pattern:$0x75316420]
  %v615 = vld.sshfl [vmem:[#allocation1 + $0x8] sm:$0xff pattern:$0x75316420]
  %v617 = vsel %vm512, %v24, 0
  %v619 = vsel %vm516, %v614, 0
  %v621 = vsel %vm516, %v615, 0
  %623 = vmatpush.msra.mxu0 0.0
  %624 = vmatpush.msra.mxu0 0.0
  %625 = vmatpush.msra.mxu0 0.0
  %626 = vmatpush.msra.mxu0 0.0
  %627 = vmatpush.msra.mxu0 0.0
  %628 = vmatpush.msra.mxu0 0.0
  %629 = vmatpush.msra.mxu0 0.0
  %630 = vmatpush.msra.mxu0 0.0
  %631 = vmatpush.msra.mxu0 0.0
  %632 = vmatpush.msra.mxu0 0.0
  %633 = vmatpush.msra.mxu0 0.0
  %634 = vmatpush.msra.mxu0 0.0
  %635 = vmatpush.msra.mxu0 0.0
  %636 = vmatpush.msra.mxu0 0.0
  %637 = vmatpush.msra.mxu0 0.0
  %638 = vmatpush.msra.mxu0 %v619
  %639 = vmatmul.f32.gmra.mxu0 %v617
  %v640 = vpop.f32.mrf.mxu0
  %v641 = vadd.f32 0.0, %v640
  %642 = vdwg.mxu0
  %643 = vmatpush.msra.mxu0 0.0
  %644 = vmatpush.msra.mxu0 0.0
  %645 = vmatpush.msra.mxu0 0.0
  %646 = vmatpush.msra.mxu0 0.0
  %647 = vmatpush.msra.mxu0 0.0
  %648 = vmatpush.msra.mxu0 0.0
  %649 = vmatpush.msra.mxu0 0.0
  %650 = vmatpush.msra.mxu0 0.0
  %651 = vmatpush.msra.mxu0 0.0
  %652 = vmatpush.msra.mxu0 0.0
  %653 = vmatpush.msra.mxu0 0.0
  %654 = vmatpush.msra.mxu0 0.0
  %655 = vmatpush.msra.mxu0 0.0
  %656 = vmatpush.msra.mxu0 0.0
  %657 = vmatpush.msra.mxu0 0.0
  %658 = vmatpush.msra.mxu0 %v621
  %659 = vmatmul.f32.gmra.mxu0 %v617
  %v660 = vpop.f32.mrf.mxu0
  %v661 = vadd.f32 0.0, %v660
  %662 = vdwg.mxu0
  %vm663 = vcmp.gt.f32.partialorder %v539, 0.0
  %vm664 = vcmp.gt.f32.partialorder %v559, 0.0
  %vm665 = vcmp.gt.f32.partialorder %v590, 0.0
  %vm666 = vcmp.gt.f32.partialorder %v610, 0.0
  %vm667 = vcmp.gt.f32.partialorder %v641, 0.0
  %vm668 = vcmp.gt.f32.partialorder %v661, 0.0
  %v669 = vmul.f32 %v539, 0.2
  %v670 = vmul.f32 %v559, 0.2
  %v671 = vmul.f32 %v590, 0.2
  %v672 = vmul.f32 %v610, 0.2
  %v673 = vmul.f32 %v641, 0.2
  %v674 = vmul.f32 %v661, 0.2
  %v675 = vsel %vm663, %v539, %v669
  %v676 = vsel %vm664, %v559, %v670
  %v677 = vsel %vm665, %v590, %v671
  %v678 = vsel %vm666, %v610, %v672
  %v679 = vsel %vm667, %v641, %v673
  %v680 = vsel %vm668, %v661, %v674
  %681 = vst [vmem:[#allocation1] ss:$2 sm:$0xff] %v25
  %v682 = vld.sshfl [vmem:[#allocation1] sm:$0xff pattern:$0x75316420]
  %v683 = vld.sshfl [vmem:[#allocation1 + $0x8] sm:$0xff pattern:$0x75316420]
  %s684 = scalar_lea.vmem [#allocation1], 16
  %685 = vst [vmem:[%s684] ss:$2 sm:$0xff] %v26
  %v686 = vld.sshfl [vmem:[#allocation1 + $0x10] sm:$0xff pattern:$0x75316420]
  %v687 = vld.sshfl [vmem:[#allocation1 + $0x18] sm:$0xff pattern:$0x75316420]
  %s688 = scalar_lea.vmem [#allocation1], 32
  %689 = vst [vmem:[%s688] ss:$2 sm:$0xff] %v27
  %v690 = vld.sshfl [vmem:[#allocation1 + $0x20] sm:$0xff pattern:$0x75316420]
  %v691 = vld.sshfl [vmem:[#allocation1 + $0x28] sm:$0xff pattern:$0x75316420]
  %v698 = vsel %vm516, %v682, 0.0
  %v699 = vrot.slane %v698, 4
  %v700 = vadd.f32 %v698, %v699
  %v701 = vrot.slane %v700, 2
  %v702 = vadd.f32 %v700, %v701
  %v703 = vrot.slane %v702, 1
  %v704 = vadd.f32 %v702, %v703
  %v705 = vsel %vm516, %v683, 0.0
  %v706 = vrot.slane %v705, 4
  %v707 = vadd.f32 %v705, %v706
  %v708 = vrot.slane %v707, 2
  %v709 = vadd.f32 %v707, %v708
  %v710 = vrot.slane %v709, 1
  %v711 = vadd.f32 %v709, %v710
  %v712 = vsel %vm516, %v686, 0.0
  %v713 = vrot.slane %v712, 4
  %v714 = vadd.f32 %v712, %v713
  %v715 = vrot.slane %v714, 2
  %v716 = vadd.f32 %v714, %v715
  %v717 = vrot.slane %v716, 1
  %v718 = vadd.f32 %v716, %v717
  %v719 = vsel %vm516, %v687, 0.0
  %v720 = vrot.slane %v719, 4
  %v721 = vadd.f32 %v719, %v720
  %v722 = vrot.slane %v721, 2
  %v723 = vadd.f32 %v721, %v722
  %v724 = vrot.slane %v723, 1
  %v725 = vadd.f32 %v723, %v724
  %v726 = vsel %vm516, %v690, 0.0
  %v727 = vrot.slane %v726, 4
  %v728 = vadd.f32 %v726, %v727
  %v729 = vrot.slane %v728, 2
  %v730 = vadd.f32 %v728, %v729
  %v731 = vrot.slane %v730, 1
  %v732 = vadd.f32 %v730, %v731
  %v733 = vsel %vm516, %v691, 0.0
  %v734 = vrot.slane %v733, 4
  %v735 = vadd.f32 %v733, %v734
  %v736 = vrot.slane %v735, 2
  %v737 = vadd.f32 %v735, %v736
  %v738 = vrot.slane %v737, 1
  %v739 = vadd.f32 %v737, %v738
  %v740 = vsel %vm663, 1.0, 0.2
  %v741 = vsel %vm664, 1.0, 0.2
  %v742 = vsel %vm665, 1.0, 0.2
  %v743 = vsel %vm666, 1.0, 0.2
  %v744 = vsel %vm667, 1.0, 0.2
  %v745 = vsel %vm668, 1.0, 0.2
  %v746 = vmul.f32 %v704, %v740
  %v747 = vmul.f32 %v711, %v741
  %v748 = vmul.f32 %v718, %v742
  %v749 = vmul.f32 %v725, %v743
  %v750 = vmul.f32 %v732, %v744
  %v751 = vmul.f32 %v739, %v745
  %752 = vmatpush.msra.mxu0 %v58
  %753 = vmatpush.msra.mxu0 %v56
  %754 = vmatpush.msra.mxu0 %v54
  %755 = vmatpush.msra.mxu0 %v52
  %756 = vmatpush.msra.mxu0 %v50
  %757 = vmatpush.msra.mxu0 %v48
  %758 = vmatpush.msra.mxu0 %v46
  %759 = vmatpush.msra.mxu0 %v44
  %760 = vmatpush.msra.mxu0 %v42
  %761 = vmatpush.msra.mxu0 %v40
  %762 = vmatpush.msra.mxu0 %v38
  %763 = vmatpush.msra.mxu0 %v36
  %764 = vmatpush.msra.mxu0 %v34
  %765 = vmatpush.msra.mxu0 %v32
  %766 = vmatpush.msra.mxu0 %v30
  %767 = vmatpush.msra.mxu0 %v28
  %768 = vmatmul.f32.gmra.mxu0 %v675
  %v769 = vpop.f32.mrf.mxu0
  %v770 = vadd.f32 0.0, %v769
  %771 = vmatmul.f32.gmra.mxu0 %v746
  %v772 = vpop.f32.mrf.mxu0
  %v773 = vadd.f32 0.0, %v772
  %774 = vdwg.mxu0
  %775 = vmatpush.msra.mxu0 %v90
  %776 = vmatpush.msra.mxu0 %v88
  %777 = vmatpush.msra.mxu0 %v86
  %778 = vmatpush.msra.mxu0 %v84
  %779 = vmatpush.msra.mxu0 %v82
  %780 = vmatpush.msra.mxu0 %v80
  %781 = vmatpush.msra.mxu0 %v78
  %782 = vmatpush.msra.mxu0 %v76
  %783 = vmatpush.msra.mxu0 %v74
  %784 = vmatpush.msra.mxu0 %v72
  %785 = vmatpush.msra.mxu0 %v70
  %786 = vmatpush.msra.mxu0 %v68
  %787 = vmatpush.msra.mxu0 %v66
  %788 = vmatpush.msra.mxu0 %v64
  %789 = vmatpush.msra.mxu0 %v62
  %790 = vmatpush.msra.mxu0 %v60
  %791 = vmatmul.f32.gmra.mxu0 %v676
  %v792 = vpop.f32.mrf.mxu0
  %v793 = vadd.f32 %v770, %v792
  %794 = vmatmul.f32.gmra.mxu0 %v747
  %v795 = vpop.f32.mrf.mxu0
  %v796 = vadd.f32 %v773, %v795
  %797 = vdwg.mxu0
  %798 = vmatpush.msra.mxu0 %v59
  %799 = vmatpush.msra.mxu0 %v57
  %800 = vmatpush.msra.mxu0 %v55
  %801 = vmatpush.msra.mxu0 %v53
  %802 = vmatpush.msra.mxu0 %v51
  %803 = vmatpush.msra.mxu0 %v49
  %804 = vmatpush.msra.mxu0 %v47
  %805 = vmatpush.msra.mxu0 %v45
  %806 = vmatpush.msra.mxu0 %v43
  %807 = vmatpush.msra.mxu0 %v41
  %808 = vmatpush.msra.mxu0 %v39
  %809 = vmatpush.msra.mxu0 %v37
  %810 = vmatpush.msra.mxu0 %v35
  %811 = vmatpush.msra.mxu0 %v33
  %812 = vmatpush.msra.mxu0 %v31
  %813 = vmatpush.msra.mxu0 %v29
  %814 = vmatmul.f32.gmra.mxu0 %v675
  %v815 = vpop.f32.mrf.mxu0
  %v816 = vadd.f32 0.0, %v815
  %817 = vmatmul.f32.gmra.mxu0 %v746
  %v818 = vpop.f32.mrf.mxu0
  %v819 = vadd.f32 0.0, %v818
  %820 = vdwg.mxu0
  %821 = vmatpush.msra.mxu0 %v91
  %822 = vmatpush.msra.mxu0 %v89
  %823 = vmatpush.msra.mxu0 %v87
  %824 = vmatpush.msra.mxu0 %v85
  %825 = vmatpush.msra.mxu0 %v83
  %826 = vmatpush.msra.mxu0 %v81
  %827 = vmatpush.msra.mxu0 %v79
  %828 = vmatpush.msra.mxu0 %v77
  %829 = vmatpush.msra.mxu0 %v75
  %830 = vmatpush.msra.mxu0 %v73
  %831 = vmatpush.msra.mxu0 %v71
  %832 = vmatpush.msra.mxu0 %v69
  %833 = vmatpush.msra.mxu0 %v67
  %834 = vmatpush.msra.mxu0 %v65
  %835 = vmatpush.msra.mxu0 %v63
  %836 = vmatpush.msra.mxu0 %v61
  %837 = vmatmul.f32.gmra.mxu0 %v676
  %v838 = vpop.f32.mrf.mxu0
  %v839 = vadd.f32 %v816, %v838
  %840 = vmatmul.f32.gmra.mxu0 %v747
  %v841 = vpop.f32.mrf.mxu0
  %v842 = vadd.f32 %v819, %v841
  %843 = vdwg.mxu0
  %844 = vmatpush.msra.mxu0 %v122
  %845 = vmatpush.msra.mxu0 %v120
  %846 = vmatpush.msra.mxu0 %v118
  %847 = vmatpush.msra.mxu0 %v116
  %848 = vmatpush.msra.mxu0 %v114
  %849 = vmatpush.msra.mxu0 %v112
  %850 = vmatpush.msra.mxu0 %v110
  %851 = vmatpush.msra.mxu0 %v108
  %852 = vmatpush.msra.mxu0 %v106
  %853 = vmatpush.msra.mxu0 %v104
  %854 = vmatpush.msra.mxu0 %v102
  %855 = vmatpush.msra.mxu0 %v100
  %856 = vmatpush.msra.mxu0 %v98
  %857 = vmatpush.msra.mxu0 %v96
  %858 = vmatpush.msra.mxu0 %v94
  %859 = vmatpush.msra.mxu0 %v92
  %860 = vmatmul.f32.gmra.mxu0 %v677
  %v861 = vpop.f32.mrf.mxu0
  %v862 = vadd.f32 0.0, %v861
  %863 = vmatmul.f32.gmra.mxu0 %v748
  %v864 = vpop.f32.mrf.mxu0
  %v865 = vadd.f32 0.0, %v864
  %866 = vdwg.mxu0
  %867 = vmatpush.msra.mxu0 %v154
  %868 = vmatpush.msra.mxu0 %v152
  %869 = vmatpush.msra.mxu0 %v150
  %870 = vmatpush.msra.mxu0 %v148
  %871 = vmatpush.msra.mxu0 %v146
  %872 = vmatpush.msra.mxu0 %v144
  %873 = vmatpush.msra.mxu0 %v142
  %874 = vmatpush.msra.mxu0 %v140
  %875 = vmatpush.msra.mxu0 %v138
  %876 = vmatpush.msra.mxu0 %v136
  %877 = vmatpush.msra.mxu0 %v134
  %878 = vmatpush.msra.mxu0 %v132
  %879 = vmatpush.msra.mxu0 %v130
  %880 = vmatpush.msra.mxu0 %v128
  %881 = vmatpush.msra.mxu0 %v126
  %882 = vmatpush.msra.mxu0 %v124
  %883 = vmatmul.f32.gmra.mxu0 %v678
  %v884 = vpop.f32.mrf.mxu0
  %v885 = vadd.f32 %v862, %v884
  %886 = vmatmul.f32.gmra.mxu0 %v749
  %v887 = vpop.f32.mrf.mxu0
  %v888 = vadd.f32 %v865, %v887
  %889 = vdwg.mxu0
  %890 = vmatpush.msra.mxu0 %v123
  %891 = vmatpush.msra.mxu0 %v121
  %892 = vmatpush.msra.mxu0 %v119
  %893 = vmatpush.msra.mxu0 %v117
  %894 = vmatpush.msra.mxu0 %v115
  %895 = vmatpush.msra.mxu0 %v113
  %896 = vmatpush.msra.mxu0 %v111
  %897 = vmatpush.msra.mxu0 %v109
  %898 = vmatpush.msra.mxu0 %v107
  %899 = vmatpush.msra.mxu0 %v105
  %900 = vmatpush.msra.mxu0 %v103
  %901 = vmatpush.msra.mxu0 %v101
  %902 = vmatpush.msra.mxu0 %v99
  %903 = vmatpush.msra.mxu0 %v97
  %904 = vmatpush.msra.mxu0 %v95
  %905 = vmatpush.msra.mxu0 %v93
  %906 = vmatmul.f32.gmra.mxu0 %v677
  %v907 = vpop.f32.mrf.mxu0
  %v908 = vadd.f32 0.0, %v907
  %909 = vmatmul.f32.gmra.mxu0 %v748
  %v910 = vpop.f32.mrf.mxu0
  %v911 = vadd.f32 0.0, %v910
  %912 = vdwg.mxu0
  %913 = vmatpush.msra.mxu0 %v155
  %914 = vmatpush.msra.mxu0 %v153
  %915 = vmatpush.msra.mxu0 %v151
  %916 = vmatpush.msra.mxu0 %v149
  %917 = vmatpush.msra.mxu0 %v147
  %918 = vmatpush.msra.mxu0 %v145
  %919 = vmatpush.msra.mxu0 %v143
  %920 = vmatpush.msra.mxu0 %v141
  %921 = vmatpush.msra.mxu0 %v139
  %922 = vmatpush.msra.mxu0 %v137
  %923 = vmatpush.msra.mxu0 %v135
  %924 = vmatpush.msra.mxu0 %v133
  %925 = vmatpush.msra.mxu0 %v131
  %926 = vmatpush.msra.mxu0 %v129
  %927 = vmatpush.msra.mxu0 %v127
  %928 = vmatpush.msra.mxu0 %v125
  %929 = vmatmul.f32.gmra.mxu0 %v678
  %v930 = vpop.f32.mrf.mxu0
  %v931 = vadd.f32 %v908, %v930
  %932 = vmatmul.f32.gmra.mxu0 %v749
  %v933 = vpop.f32.mrf.mxu0
  %v934 = vadd.f32 %v911, %v933
  %935 = vdwg.mxu0
  %936 = vmatpush.msra.mxu0 %v186
  %937 = vmatpush.msra.mxu0 %v184
  %938 = vmatpush.msra.mxu0 %v182
  %939 = vmatpush.msra.mxu0 %v180
  %940 = vmatpush.msra.mxu0 %v178
  %941 = vmatpush.msra.mxu0 %v176
  %942 = vmatpush.msra.mxu0 %v174
  %943 = vmatpush.msra.mxu0 %v172
  %944 = vmatpush.msra.mxu0 %v170
  %945 = vmatpush.msra.mxu0 %v168
  %946 = vmatpush.msra.mxu0 %v166
  %947 = vmatpush.msra.mxu0 %v164
  %948 = vmatpush.msra.mxu0 %v162
  %949 = vmatpush.msra.mxu0 %v160
  %950 = vmatpush.msra.mxu0 %v158
  %951 = vmatpush.msra.mxu0 %v156
  %952 = vmatmul.f32.gmra.mxu0 %v679
  %v953 = vpop.f32.mrf.mxu0
  %v954 = vadd.f32 0.0, %v953
  %955 = vmatmul.f32.gmra.mxu0 %v750
  %v956 = vpop.f32.mrf.mxu0
  %v957 = vadd.f32 0.0, %v956
  %958 = vdwg.mxu0
  %959 = vmatpush.msra.mxu0 %v218
  %960 = vmatpush.msra.mxu0 %v216
  %961 = vmatpush.msra.mxu0 %v214
  %962 = vmatpush.msra.mxu0 %v212
  %963 = vmatpush.msra.mxu0 %v210
  %964 = vmatpush.msra.mxu0 %v208
  %965 = vmatpush.msra.mxu0 %v206
  %966 = vmatpush.msra.mxu0 %v204
  %967 = vmatpush.msra.mxu0 %v202
  %968 = vmatpush.msra.mxu0 %v200
  %969 = vmatpush.msra.mxu0 %v198
  %970 = vmatpush.msra.mxu0 %v196
  %971 = vmatpush.msra.mxu0 %v194
  %972 = vmatpush.msra.mxu0 %v192
  %973 = vmatpush.msra.mxu0 %v190
  %974 = vmatpush.msra.mxu0 %v188
  %975 = vmatmul.f32.gmra.mxu0 %v680
  %v976 = vpop.f32.mrf.mxu0
  %v977 = vadd.f32 %v954, %v976
  %978 = vmatmul.f32.gmra.mxu0 %v751
  %v979 = vpop.f32.mrf.mxu0
  %v980 = vadd.f32 %v957, %v979
  %981 = vdwg.mxu0
  %982 = vmatpush.msra.mxu0 %v187
  %983 = vmatpush.msra.mxu0 %v185
  %984 = vmatpush.msra.mxu0 %v183
  %985 = vmatpush.msra.mxu0 %v181
  %986 = vmatpush.msra.mxu0 %v179
  %987 = vmatpush.msra.mxu0 %v177
  %988 = vmatpush.msra.mxu0 %v175
  %989 = vmatpush.msra.mxu0 %v173
  %990 = vmatpush.msra.mxu0 %v171
  %991 = vmatpush.msra.mxu0 %v169
  %992 = vmatpush.msra.mxu0 %v167
  %993 = vmatpush.msra.mxu0 %v165
  %994 = vmatpush.msra.mxu0 %v163
  %995 = vmatpush.msra.mxu0 %v161
  %996 = vmatpush.msra.mxu0 %v159
  %997 = vmatpush.msra.mxu0 %v157
  %998 = vmatmul.f32.gmra.mxu0 %v679
  %v999 = vpop.f32.mrf.mxu0
  %v1000 = vadd.f32 0.0, %v999
  %1001 = vmatmul.f32.gmra.mxu0 %v750
  %v1002 = vpop.f32.mrf.mxu0
  %v1003 = vadd.f32 0.0, %v1002
  %1004 = vdwg.mxu0
  %1005 = vmatpush.msra.mxu0 %v219
  %1006 = vmatpush.msra.mxu0 %v217
  %1007 = vmatpush.msra.mxu0 %v215
  %1008 = vmatpush.msra.mxu0 %v213
  %1009 = vmatpush.msra.mxu0 %v211
  %1010 = vmatpush.msra.mxu0 %v209
  %1011 = vmatpush.msra.mxu0 %v207
  %1012 = vmatpush.msra.mxu0 %v205
  %1013 = vmatpush.msra.mxu0 %v203
  %1014 = vmatpush.msra.mxu0 %v201
  %1015 = vmatpush.msra.mxu0 %v199
  %1016 = vmatpush.msra.mxu0 %v197
  %1017 = vmatpush.msra.mxu0 %v195
  %1018 = vmatpush.msra.mxu0 %v193
  %1019 = vmatpush.msra.mxu0 %v191
  %1020 = vmatpush.msra.mxu0 %v189
  %1021 = vmatmul.f32.gmra.mxu0 %v680
  %v1022 = vpop.f32.mrf.mxu0
  %v1023 = vadd.f32 %v1000, %v1022
  %1024 = vmatmul.f32.gmra.mxu0 %v751
  %v1025 = vpop.f32.mrf.mxu0
  %v1026 = vadd.f32 %v1003, %v1025
  %1027 = vdwg.mxu0
  %vm1028 = vcmp.gt.f32.partialorder %v793, 0.0
  %vm1029 = vcmp.gt.f32.partialorder %v839, 0.0
  %vm1030 = vcmp.gt.f32.partialorder %v885, 0.0
  %vm1031 = vcmp.gt.f32.partialorder %v931, 0.0
  %vm1032 = vcmp.gt.f32.partialorder %v977, 0.0
  %vm1033 = vcmp.gt.f32.partialorder %v1023, 0.0
  %v1034 = vmul.f32 %v793, 0.2
  %v1035 = vmul.f32 %v839, 0.2
  %v1036 = vmul.f32 %v885, 0.2
  %v1037 = vmul.f32 %v931, 0.2
  %v1038 = vmul.f32 %v977, 0.2
  %v1039 = vmul.f32 %v1023, 0.2
  %v1040 = vsel %vm1028, %v793, %v1034
  %v1041 = vsel %vm1029, %v839, %v1035
  %v1042 = vsel %vm1030, %v885, %v1036
  %v1043 = vsel %vm1031, %v931, %v1037
  %v1044 = vsel %vm1032, %v977, %v1038
  %v1045 = vsel %vm1033, %v1023, %v1039
  %v1046 = vsel %vm1028, 1.0, 0.2
  %v1047 = vsel %vm1029, 1.0, 0.2
  %v1048 = vsel %vm1030, 1.0, 0.2
  %v1049 = vsel %vm1031, 1.0, 0.2
  %v1050 = vsel %vm1032, 1.0, 0.2
  %v1051 = vsel %vm1033, 1.0, 0.2
  %v1052 = vmul.f32 %v796, %v1046
  %v1053 = vmul.f32 %v842, %v1047
  %v1054 = vmul.f32 %v888, %v1048
  %v1055 = vmul.f32 %v934, %v1049
  %v1056 = vmul.f32 %v980, %v1050
  %v1057 = vmul.f32 %v1026, %v1051
  %1058 = vmatpush.msra.mxu0 %v250
  %1059 = vmatpush.msra.mxu0 %v248
  %1060 = vmatpush.msra.mxu0 %v246
  %1061 = vmatpush.msra.mxu0 %v244
  %1062 = vmatpush.msra.mxu0 %v242
  %1063 = vmatpush.msra.mxu0 %v240
  %1064 = vmatpush.msra.mxu0 %v238
  %1065 = vmatpush.msra.mxu0 %v236
  %1066 = vmatpush.msra.mxu0 %v234
  %1067 = vmatpush.msra.mxu0 %v232
  %1068 = vmatpush.msra.mxu0 %v230
  %1069 = vmatpush.msra.mxu0 %v228
  %1070 = vmatpush.msra.mxu0 %v226
  %1071 = vmatpush.msra.mxu0 %v224
  %1072 = vmatpush.msra.mxu0 %v222
  %1073 = vmatpush.msra.mxu0 %v220
  %1074 = vmatmul.f32.gmra.mxu0 %v1040
  %v1075 = vpop.f32.mrf.mxu0
  %v1076 = vadd.f32 0.0, %v1075
  %1077 = vmatmul.f32.gmra.mxu0 %v1052
  %v1078 = vpop.f32.mrf.mxu0
  %v1079 = vadd.f32 0.0, %v1078
  %1080 = vdwg.mxu0
  %1081 = vmatpush.msra.mxu0 %v282
  %1082 = vmatpush.msra.mxu0 %v280
  %1083 = vmatpush.msra.mxu0 %v278
  %1084 = vmatpush.msra.mxu0 %v276
  %1085 = vmatpush.msra.mxu0 %v274
  %1086 = vmatpush.msra.mxu0 %v272
  %1087 = vmatpush.msra.mxu0 %v270
  %1088 = vmatpush.msra.mxu0 %v268
  %1089 = vmatpush.msra.mxu0 %v266
  %1090 = vmatpush.msra.mxu0 %v264
  %1091 = vmatpush.msra.mxu0 %v262
  %1092 = vmatpush.msra.mxu0 %v260
  %1093 = vmatpush.msra.mxu0 %v258
  %1094 = vmatpush.msra.mxu0 %v256
  %1095 = vmatpush.msra.mxu0 %v254
  %1096 = vmatpush.msra.mxu0 %v252
  %1097 = vmatmul.f32.gmra.mxu0 %v1041
  %v1098 = vpop.f32.mrf.mxu0
  %v1099 = vadd.f32 %v1076, %v1098
  %1100 = vmatmul.f32.gmra.mxu0 %v1053
  %v1101 = vpop.f32.mrf.mxu0
  %v1102 = vadd.f32 %v1079, %v1101
  %1103 = vdwg.mxu0
  %1104 = vmatpush.msra.mxu0 %v251
  %1105 = vmatpush.msra.mxu0 %v249
  %1106 = vmatpush.msra.mxu0 %v247
  %1107 = vmatpush.msra.mxu0 %v245
  %1108 = vmatpush.msra.mxu0 %v243
  %1109 = vmatpush.msra.mxu0 %v241
  %1110 = vmatpush.msra.mxu0 %v239
  %1111 = vmatpush.msra.mxu0 %v237
  %1112 = vmatpush.msra.mxu0 %v235
  %1113 = vmatpush.msra.mxu0 %v233
  %1114 = vmatpush.msra.mxu0 %v231
  %1115 = vmatpush.msra.mxu0 %v229
  %1116 = vmatpush.msra.mxu0 %v227
  %1117 = vmatpush.msra.mxu0 %v225
  %1118 = vmatpush.msra.mxu0 %v223
  %1119 = vmatpush.msra.mxu0 %v221
  %1120 = vmatmul.f32.gmra.mxu0 %v1040
  %v1121 = vpop.f32.mrf.mxu0
  %v1122 = vadd.f32 0.0, %v1121
  %1123 = vmatmul.f32.gmra.mxu0 %v1052
  %v1124 = vpop.f32.mrf.mxu0
  %v1125 = vadd.f32 0.0, %v1124
  %1126 = vdwg.mxu0
  %1127 = vmatpush.msra.mxu0 %v283
  %1128 = vmatpush.msra.mxu0 %v281
  %1129 = vmatpush.msra.mxu0 %v279
  %1130 = vmatpush.msra.mxu0 %v277
  %1131 = vmatpush.msra.mxu0 %v275
  %1132 = vmatpush.msra.mxu0 %v273
  %1133 = vmatpush.msra.mxu0 %v271
  %1134 = vmatpush.msra.mxu0 %v269
  %1135 = vmatpush.msra.mxu0 %v267
  %1136 = vmatpush.msra.mxu0 %v265
  %1137 = vmatpush.msra.mxu0 %v263
  %1138 = vmatpush.msra.mxu0 %v261
  %1139 = vmatpush.msra.mxu0 %v259
  %1140 = vmatpush.msra.mxu0 %v257
  %1141 = vmatpush.msra.mxu0 %v255
  %1142 = vmatpush.msra.mxu0 %v253
  %1143 = vmatmul.f32.gmra.mxu0 %v1041
  %v1144 = vpop.f32.mrf.mxu0
  %v1145 = vadd.f32 %v1122, %v1144
  %1146 = vmatmul.f32.gmra.mxu0 %v1053
  %v1147 = vpop.f32.mrf.mxu0
  %v1148 = vadd.f32 %v1125, %v1147
  %1149 = vdwg.mxu0
  %1150 = vmatpush.msra.mxu0 %v314
  %1151 = vmatpush.msra.mxu0 %v312
  %1152 = vmatpush.msra.mxu0 %v310
  %1153 = vmatpush.msra.mxu0 %v308
  %1154 = vmatpush.msra.mxu0 %v306
  %1155 = vmatpush.msra.mxu0 %v304
  %1156 = vmatpush.msra.mxu0 %v302
  %1157 = vmatpush.msra.mxu0 %v300
  %1158 = vmatpush.msra.mxu0 %v298
  %1159 = vmatpush.msra.mxu0 %v296
  %1160 = vmatpush.msra.mxu0 %v294
  %1161 = vmatpush.msra.mxu0 %v292
  %1162 = vmatpush.msra.mxu0 %v290
  %1163 = vmatpush.msra.mxu0 %v288
  %1164 = vmatpush.msra.mxu0 %v286
  %1165 = vmatpush.msra.mxu0 %v284
  %1166 = vmatmul.f32.gmra.mxu0 %v1042
  %v1167 = vpop.f32.mrf.mxu0
  %v1168 = vadd.f32 0.0, %v1167
  %1169 = vmatmul.f32.gmra.mxu0 %v1054
  %v1170 = vpop.f32.mrf.mxu0
  %v1171 = vadd.f32 0.0, %v1170
  %1172 = vdwg.mxu0
  %1173 = vmatpush.msra.mxu0 %v346
  %1174 = vmatpush.msra.mxu0 %v344
  %1175 = vmatpush.msra.mxu0 %v342
  %1176 = vmatpush.msra.mxu0 %v340
  %1177 = vmatpush.msra.mxu0 %v338
  %1178 = vmatpush.msra.mxu0 %v336
  %1179 = vmatpush.msra.mxu0 %v334
  %1180 = vmatpush.msra.mxu0 %v332
  %1181 = vmatpush.msra.mxu0 %v330
  %1182 = vmatpush.msra.mxu0 %v328
  %1183 = vmatpush.msra.mxu0 %v326
  %1184 = vmatpush.msra.mxu0 %v324
  %1185 = vmatpush.msra.mxu0 %v322
  %1186 = vmatpush.msra.mxu0 %v320
  %1187 = vmatpush.msra.mxu0 %v318
  %1188 = vmatpush.msra.mxu0 %v316
  %1189 = vmatmul.f32.gmra.mxu0 %v1043
  %v1190 = vpop.f32.mrf.mxu0
  %v1191 = vadd.f32 %v1168, %v1190
  %1192 = vmatmul.f32.gmra.mxu0 %v1055
  %v1193 = vpop.f32.mrf.mxu0
  %v1194 = vadd.f32 %v1171, %v1193
  %1195 = vdwg.mxu0
  %1196 = vmatpush.msra.mxu0 %v315
  %1197 = vmatpush.msra.mxu0 %v313
  %1198 = vmatpush.msra.mxu0 %v311
  %1199 = vmatpush.msra.mxu0 %v309
  %1200 = vmatpush.msra.mxu0 %v307
  %1201 = vmatpush.msra.mxu0 %v305
  %1202 = vmatpush.msra.mxu0 %v303
  %1203 = vmatpush.msra.mxu0 %v301
  %1204 = vmatpush.msra.mxu0 %v299
  %1205 = vmatpush.msra.mxu0 %v297
  %1206 = vmatpush.msra.mxu0 %v295
  %1207 = vmatpush.msra.mxu0 %v293
  %1208 = vmatpush.msra.mxu0 %v291
  %1209 = vmatpush.msra.mxu0 %v289
  %1210 = vmatpush.msra.mxu0 %v287
  %1211 = vmatpush.msra.mxu0 %v285
  %1212 = vmatmul.f32.gmra.mxu0 %v1042
  %v1213 = vpop.f32.mrf.mxu0
  %v1214 = vadd.f32 0.0, %v1213
  %1215 = vmatmul.f32.gmra.mxu0 %v1054
  %v1216 = vpop.f32.mrf.mxu0
  %v1217 = vadd.f32 0.0, %v1216
  %1218 = vdwg.mxu0
  %1219 = vmatpush.msra.mxu0 %v347
  %1220 = vmatpush.msra.mxu0 %v345
  %1221 = vmatpush.msra.mxu0 %v343
  %1222 = vmatpush.msra.mxu0 %v341
  %1223 = vmatpush.msra.mxu0 %v339
  %1224 = vmatpush.msra.mxu0 %v337
  %1225 = vmatpush.msra.mxu0 %v335
  %1226 = vmatpush.msra.mxu0 %v333
  %1227 = vmatpush.msra.mxu0 %v331
  %1228 = vmatpush.msra.mxu0 %v329
  %1229 = vmatpush.msra.mxu0 %v327
  %1230 = vmatpush.msra.mxu0 %v325
  %1231 = vmatpush.msra.mxu0 %v323
  %1232 = vmatpush.msra.mxu0 %v321
  %1233 = vmatpush.msra.mxu0 %v319
  %1234 = vmatpush.msra.mxu0 %v317
  %1235 = vmatmul.f32.gmra.mxu0 %v1043
  %v1236 = vpop.f32.mrf.mxu0
  %v1237 = vadd.f32 %v1214, %v1236
  %1238 = vmatmul.f32.gmra.mxu0 %v1055
  %v1239 = vpop.f32.mrf.mxu0
  %v1240 = vadd.f32 %v1217, %v1239
  %1241 = vdwg.mxu0
  %1242 = vmatpush.msra.mxu0 %v378
  %1243 = vmatpush.msra.mxu0 %v376
  %1244 = vmatpush.msra.mxu0 %v374
  %1245 = vmatpush.msra.mxu0 %v372
  %1246 = vmatpush.msra.mxu0 %v370
  %1247 = vmatpush.msra.mxu0 %v368
  %1248 = vmatpush.msra.mxu0 %v366
  %1249 = vmatpush.msra.mxu0 %v364
  %1250 = vmatpush.msra.mxu0 %v362
  %1251 = vmatpush.msra.mxu0 %v360
  %1252 = vmatpush.msra.mxu0 %v358
  %1253 = vmatpush.msra.mxu0 %v356
  %1254 = vmatpush.msra.mxu0 %v354
  %1255 = vmatpush.msra.mxu0 %v352
  %1256 = vmatpush.msra.mxu0 %v350
  %1257 = vmatpush.msra.mxu0 %v348
  %1258 = vmatmul.f32.gmra.mxu0 %v1044
  %v1259 = vpop.f32.mrf.mxu0
  %v1260 = vadd.f32 0.0, %v1259
  %1261 = vmatmul.f32.gmra.mxu0 %v1056
  %v1262 = vpop.f32.mrf.mxu0
  %v1263 = vadd.f32 0.0, %v1262
  %1264 = vdwg.mxu0
  %1265 = vmatpush.msra.mxu0 %v410
  %1266 = vmatpush.msra.mxu0 %v408
  %1267 = vmatpush.msra.mxu0 %v406
  %1268 = vmatpush.msra.mxu0 %v404
  %1269 = vmatpush.msra.mxu0 %v402
  %1270 = vmatpush.msra.mxu0 %v400
  %1271 = vmatpush.msra.mxu0 %v398
  %1272 = vmatpush.msra.mxu0 %v396
  %1273 = vmatpush.msra.mxu0 %v394
  %1274 = vmatpush.msra.mxu0 %v392
  %1275 = vmatpush.msra.mxu0 %v390
  %1276 = vmatpush.msra.mxu0 %v388
  %1277 = vmatpush.msra.mxu0 %v386
  %1278 = vmatpush.msra.mxu0 %v384
  %1279 = vmatpush.msra.mxu0 %v382
  %1280 = vmatpush.msra.mxu0 %v380
  %1281 = vmatmul.f32.gmra.mxu0 %v1045
  %v1282 = vpop.f32.mrf.mxu0
  %v1283 = vadd.f32 %v1260, %v1282
  %1284 = vmatmul.f32.gmra.mxu0 %v1057
  %v1285 = vpop.f32.mrf.mxu0
  %v1286 = vadd.f32 %v1263, %v1285
  %1287 = vdwg.mxu0
  %1288 = vmatpush.msra.mxu0 %v379
  %1289 = vmatpush.msra.mxu0 %v377
  %1290 = vmatpush.msra.mxu0 %v375
  %1291 = vmatpush.msra.mxu0 %v373
  %1292 = vmatpush.msra.mxu0 %v371
  %1293 = vmatpush.msra.mxu0 %v369
  %1294 = vmatpush.msra.mxu0 %v367
  %1295 = vmatpush.msra.mxu0 %v365
  %1296 = vmatpush.msra.mxu0 %v363
  %1297 = vmatpush.msra.mxu0 %v361
  %1298 = vmatpush.msra.mxu0 %v359
  %1299 = vmatpush.msra.mxu0 %v357
  %1300 = vmatpush.msra.mxu0 %v355
  %1301 = vmatpush.msra.mxu0 %v353
  %1302 = vmatpush.msra.mxu0 %v351
  %1303 = vmatpush.msra.mxu0 %v349
  %1304 = vmatmul.f32.gmra.mxu0 %v1044
  %v1305 = vpop.f32.mrf.mxu0
  %v1306 = vadd.f32 0.0, %v1305
  %1307 = vmatmul.f32.gmra.mxu0 %v1056
  %v1308 = vpop.f32.mrf.mxu0
  %v1309 = vadd.f32 0.0, %v1308
  %1310 = vdwg.mxu0
  %1311 = vmatpush.msra.mxu0 %v411
  %1312 = vmatpush.msra.mxu0 %v409
  %1313 = vmatpush.msra.mxu0 %v407
  %1314 = vmatpush.msra.mxu0 %v405
  %1315 = vmatpush.msra.mxu0 %v403
  %1316 = vmatpush.msra.mxu0 %v401
  %1317 = vmatpush.msra.mxu0 %v399
  %1318 = vmatpush.msra.mxu0 %v397
  %1319 = vmatpush.msra.mxu0 %v395
  %1320 = vmatpush.msra.mxu0 %v393
  %1321 = vmatpush.msra.mxu0 %v391
  %1322 = vmatpush.msra.mxu0 %v389
  %1323 = vmatpush.msra.mxu0 %v387
  %1324 = vmatpush.msra.mxu0 %v385
  %1325 = vmatpush.msra.mxu0 %v383
  %1326 = vmatpush.msra.mxu0 %v381
  %1327 = vmatmul.f32.gmra.mxu0 %v1045
  %v1328 = vpop.f32.mrf.mxu0
  %v1329 = vadd.f32 %v1306, %v1328
  %1330 = vmatmul.f32.gmra.mxu0 %v1057
  %v1331 = vpop.f32.mrf.mxu0
  %v1332 = vadd.f32 %v1309, %v1331
  %1333 = vdwg.mxu0
  %vm1334 = vcmp.gt.f32.partialorder %v1099, 0.0
  %vm1335 = vcmp.gt.f32.partialorder %v1145, 0.0
  %vm1336 = vcmp.gt.f32.partialorder %v1191, 0.0
  %vm1337 = vcmp.gt.f32.partialorder %v1237, 0.0
  %vm1338 = vcmp.gt.f32.partialorder %v1283, 0.0
  %vm1339 = vcmp.gt.f32.partialorder %v1329, 0.0
  %v1340 = vmul.f32 %v1099, 0.2
  %v1341 = vmul.f32 %v1145, 0.2
  %v1342 = vmul.f32 %v1191, 0.2
  %v1343 = vmul.f32 %v1237, 0.2
  %v1344 = vmul.f32 %v1283, 0.2
  %v1345 = vmul.f32 %v1329, 0.2
  %v1346 = vsel %vm1334, %v1099, %v1340
  %v1347 = vsel %vm1335, %v1145, %v1341
  %v1348 = vsel %vm1336, %v1191, %v1342
  %v1349 = vsel %vm1337, %v1237, %v1343
  %v1350 = vsel %vm1338, %v1283, %v1344
  %v1351 = vsel %vm1339, %v1329, %v1345
  %v1352 = vsel %vm1334, 1.0, 0.2
  %v1353 = vsel %vm1335, 1.0, 0.2
  %v1354 = vsel %vm1336, 1.0, 0.2
  %v1355 = vsel %vm1337, 1.0, 0.2
  %v1356 = vsel %vm1338, 1.0, 0.2
  %v1357 = vsel %vm1339, 1.0, 0.2
  %v1358 = vmul.f32 %v1102, %v1352
  %v1359 = vmul.f32 %v1148, %v1353
  %v1360 = vmul.f32 %v1194, %v1354
  %v1361 = vmul.f32 %v1240, %v1355
  %v1362 = vmul.f32 %v1286, %v1356
  %v1363 = vmul.f32 %v1332, %v1357
  %1364 = vmatpush.msra.mxu0 %v427
  %1365 = vmatpush.msra.mxu0 %v426
  %1366 = vmatpush.msra.mxu0 %v425
  %1367 = vmatpush.msra.mxu0 %v424
  %1368 = vmatpush.msra.mxu0 %v423
  %1369 = vmatpush.msra.mxu0 %v422
  %1370 = vmatpush.msra.mxu0 %v421
  %1371 = vmatpush.msra.mxu0 %v420
  %1372 = vmatpush.msra.mxu0 %v419
  %1373 = vmatpush.msra.mxu0 %v418
  %1374 = vmatpush.msra.mxu0 %v417
  %1375 = vmatpush.msra.mxu0 %v416
  %1376 = vmatpush.msra.mxu0 %v415
  %1377 = vmatpush.msra.mxu0 %v414
  %1378 = vmatpush.msra.mxu0 %v413
  %1379 = vmatpush.msra.mxu0 %v412
  %1380 = vmatmul.f32.gmra.mxu0 %v1346
  %v1381 = vpop.f32.mrf.mxu0
  %v1382 = vadd.f32 0.0, %v1381
  %1383 = vmatmul.f32.gmra.mxu0 %v1358
  %v1384 = vpop.f32.mrf.mxu0
  %v1385 = vadd.f32 0.0, %v1384
  %1386 = vdwg.mxu0
  %1387 = vmatpush.msra.mxu0 %v443
  %1388 = vmatpush.msra.mxu0 %v442
  %1389 = vmatpush.msra.mxu0 %v441
  %1390 = vmatpush.msra.mxu0 %v440
  %1391 = vmatpush.msra.mxu0 %v439
  %1392 = vmatpush.msra.mxu0 %v438
  %1393 = vmatpush.msra.mxu0 %v437
  %1394 = vmatpush.msra.mxu0 %v436
  %1395 = vmatpush.msra.mxu0 %v435
  %1396 = vmatpush.msra.mxu0 %v434
  %1397 = vmatpush.msra.mxu0 %v433
  %1398 = vmatpush.msra.mxu0 %v432
  %1399 = vmatpush.msra.mxu0 %v431
  %1400 = vmatpush.msra.mxu0 %v430
  %1401 = vmatpush.msra.mxu0 %v429
  %1402 = vmatpush.msra.mxu0 %v428
  %1403 = vmatmul.f32.gmra.mxu0 %v1347
  %v1404 = vpop.f32.mrf.mxu0
  %v1405 = vadd.f32 %v1382, %v1404
  %1406 = vmatmul.f32.gmra.mxu0 %v1359
  %v1407 = vpop.f32.mrf.mxu0
  %v1408 = vadd.f32 %v1385, %v1407
  %1409 = vdwg.mxu0
  %1410 = vmatpush.msra.mxu0 %v459
  %1411 = vmatpush.msra.mxu0 %v458
  %1412 = vmatpush.msra.mxu0 %v457
  %1413 = vmatpush.msra.mxu0 %v456
  %1414 = vmatpush.msra.mxu0 %v455
  %1415 = vmatpush.msra.mxu0 %v454
  %1416 = vmatpush.msra.mxu0 %v453
  %1417 = vmatpush.msra.mxu0 %v452
  %1418 = vmatpush.msra.mxu0 %v451
  %1419 = vmatpush.msra.mxu0 %v450
  %1420 = vmatpush.msra.mxu0 %v449
  %1421 = vmatpush.msra.mxu0 %v448
  %1422 = vmatpush.msra.mxu0 %v447
  %1423 = vmatpush.msra.mxu0 %v446
  %1424 = vmatpush.msra.mxu0 %v445
  %1425 = vmatpush.msra.mxu0 %v444
  %1426 = vmatmul.f32.gmra.mxu0 %v1348
  %v1427 = vpop.f32.mrf.mxu0
  %v1428 = vadd.f32 0.0, %v1427
  %1429 = vmatmul.f32.gmra.mxu0 %v1360
  %v1430 = vpop.f32.mrf.mxu0
  %v1431 = vadd.f32 0.0, %v1430
  %1432 = vdwg.mxu0
  %1433 = vmatpush.msra.mxu0 %v475
  %1434 = vmatpush.msra.mxu0 %v474
  %1435 = vmatpush.msra.mxu0 %v473
  %1436 = vmatpush.msra.mxu0 %v472
  %1437 = vmatpush.msra.mxu0 %v471
  %1438 = vmatpush.msra.mxu0 %v470
  %1439 = vmatpush.msra.mxu0 %v469
  %1440 = vmatpush.msra.mxu0 %v468
  %1441 = vmatpush.msra.mxu0 %v467
  %1442 = vmatpush.msra.mxu0 %v466
  %1443 = vmatpush.msra.mxu0 %v465
  %1444 = vmatpush.msra.mxu0 %v464
  %1445 = vmatpush.msra.mxu0 %v463
  %1446 = vmatpush.msra.mxu0 %v462
  %1447 = vmatpush.msra.mxu0 %v461
  %1448 = vmatpush.msra.mxu0 %v460
  %1449 = vmatmul.f32.gmra.mxu0 %v1349
  %v1450 = vpop.f32.mrf.mxu0
  %v1451 = vadd.f32 %v1428, %v1450
  %1452 = vmatmul.f32.gmra.mxu0 %v1361
  %v1453 = vpop.f32.mrf.mxu0
  %v1454 = vadd.f32 %v1431, %v1453
  %1455 = vdwg.mxu0
  %1456 = vmatpush.msra.mxu0 %v491
  %1457 = vmatpush.msra.mxu0 %v490
  %1458 = vmatpush.msra.mxu0 %v489
  %1459 = vmatpush.msra.mxu0 %v488
  %1460 = vmatpush.msra.mxu0 %v487
  %1461 = vmatpush.msra.mxu0 %v486
  %1462 = vmatpush.msra.mxu0 %v485
  %1463 = vmatpush.msra.mxu0 %v484
  %1464 = vmatpush.msra.mxu0 %v483
  %1465 = vmatpush.msra.mxu0 %v482
  %1466 = vmatpush.msra.mxu0 %v481
  %1467 = vmatpush.msra.mxu0 %v480
  %1468 = vmatpush.msra.mxu0 %v479
  %1469 = vmatpush.msra.mxu0 %v478
  %1470 = vmatpush.msra.mxu0 %v477
  %1471 = vmatpush.msra.mxu0 %v476
  %1472 = vmatmul.f32.gmra.mxu0 %v1350
  %v1473 = vpop.f32.mrf.mxu0
  %v1474 = vadd.f32 0.0, %v1473
  %1475 = vmatmul.f32.gmra.mxu0 %v1362
  %v1476 = vpop.f32.mrf.mxu0
  %v1477 = vadd.f32 0.0, %v1476
  %1478 = vdwg.mxu0
  %1479 = vmatpush.msra.mxu0 %v507
  %1480 = vmatpush.msra.mxu0 %v506
  %1481 = vmatpush.msra.mxu0 %v505
  %1482 = vmatpush.msra.mxu0 %v504
  %1483 = vmatpush.msra.mxu0 %v503
  %1484 = vmatpush.msra.mxu0 %v502
  %1485 = vmatpush.msra.mxu0 %v501
  %1486 = vmatpush.msra.mxu0 %v500
  %1487 = vmatpush.msra.mxu0 %v499
  %1488 = vmatpush.msra.mxu0 %v498
  %1489 = vmatpush.msra.mxu0 %v497
  %1490 = vmatpush.msra.mxu0 %v496
  %1491 = vmatpush.msra.mxu0 %v495
  %1492 = vmatpush.msra.mxu0 %v494
  %1493 = vmatpush.msra.mxu0 %v493
  %1494 = vmatpush.msra.mxu0 %v492
  %1495 = vmatmul.f32.gmra.mxu0 %v1351
  %v1496 = vpop.f32.mrf.mxu0
  %v1497 = vadd.f32 %v1474, %v1496
  %1498 = vmatmul.f32.gmra.mxu0 %v1363
  %v1499 = vpop.f32.mrf.mxu0
  %v1500 = vadd.f32 %v1477, %v1499
  %1501 = vdwg.mxu0
  %1502 = vst.msk [vmem:[%s5] sm:$0xff] %vm512, %v1405
  %1503 = vst.msk [vmem:[%s5 + $0x8] sm:$0xff] %vm512, %v1451
  %1504 = vst.msk [vmem:[%s5 + $0x10] sm:$0xff] %vm512, %v1497
  %v1505 = vand.u32 2147483647, %v1408
  %v1506 = vand.u32 2147483647, %v1454
  %v1507 = vand.u32 2147483647, %v1500
  %v1508 = vadd.f32 %v1505, 1e-06
  %v1509 = vadd.f32 %v1506, 1e-06
  %v1510 = vadd.f32 %v1507, 1e-06
  %v1511 = vlog2.pop %v1508
  %v1512 = vmul.f32 %v1511, 0.6931472
  %v1513 = vlog2.pop %v1509
  %v1514 = vmul.f32 %v1513, 0.6931472
  %v1515 = vlog2.pop %v1510
  %v1516 = vmul.f32 %v1515, 0.6931472
  %v1517 = vsel %vm512, %v1512, 0.0
  %v1518 = vsel %vm512, %v1514, 0.0
  %v1519 = vadd.f32 %v1517, %v1518
  %v1520 = vsel %vm512, %v1516, 0.0
  %v1521 = vadd.f32 %v1519, %v1520
  %v1522 = vsel %vm512, %v1521, 0.0
  %1523 = vadd.xlane.f32.xlu0 %v1522
  %v1524 = vpop.xlane.xlu0 %1523
  %vm1525 = vcmask 7168
  %1526 = vst.msk [vmem:[%s6] sm:$0xff] %vm1525, %v1524
  // Predicated region
  $region22: #{yuke_flow_forward.1} parent=0 // pred_check
    _
  $region23: #{yuke_flow_forward.1} parent=0 // pred_check_branch
    %1528 = sbr.rel (0) target = $region25
  $region24: #{yuke_flow_forward.1} parent=0 // pred_region
    _
  $region25: #{yuke_flow_forward.1} parent=0 // pred_fallthru
    _
  // Predicated region
  $region26: #{yuke_flow_forward.1} parent=0 // pred_check
    _
  $region27: #{yuke_flow_forward.1} parent=0 // pred_check_branch
    %1530 = sbr.rel (0) target = $region29
  $region28: #{yuke_flow_forward.1} parent=0 // pred_region
    _
  $region29: #{yuke_flow_forward.1} parent=0 // pred_fallthru
    _
  // Predicated region
  $region30: #{yuke_flow_forward.1} parent=0 // pred_check
    _
  $region31: #{yuke_flow_forward.1} parent=0 // pred_check_branch
    %1532 = sbr.rel (0) target = $region33
  $region32: #{yuke_flow_forward.1} parent=0 // pred_region
    _
  $region33: #{yuke_flow_forward.1} parent=0 // pred_fallthru
    _
  // Predicated region
  $region34: #{yuke_flow_forward.1} parent=0 // pred_check
    _
  $region35: #{yuke_flow_forward.1} parent=0 // pred_check_branch
    %1534 = sbr.rel (0) target = $region37
  $region36: #{yuke_flow_forward.1} parent=0 // pred_region
    _
  $region37: #{yuke_flow_forward.1} parent=0 // pred_fallthru
    _

</llo_original>
